<compile_context>
chip_gen: v5e
topology: v5e:2x2
jax: 0.10.0
libtpu: 0.0.40
codegen_flags: <defaults>
</compile_context>

<pallas_src>
import math
from functools import partial

import jax
import jax.numpy as jnp
from jax.experimental import pallas as pl
from jax.experimental.pallas import tpu as pltpu

# ----------------------------- model config (small, synthetic) -----------------------------
VOCAB_SIZE = 64
MAX_POS    = 16
MODEL_DIM  = 32
NUM_HEADS  = 4
HEAD_DIM   = MODEL_DIM // NUM_HEADS
FFN_DIM    = 4 * MODEL_DIM          # = 128 -> lane-dense MLP hidden
NUM_LAYERS = 2
LN_EPS     = 1e-12                  # BERT default

BATCH   = 2
SEQ_LEN = 8


# ----------------------------- in-kernel helpers (f32 math) -----------------------------
def _layernorm(x, gamma, beta, eps):
    # x: (S, D) f32 ; gamma/beta: (1, D) f32
    mu = jnp.mean(x, axis=-1, keepdims=True)
    var = jnp.mean((x - mu) ** 2, axis=-1, keepdims=True)
    return (x - mu) * jax.lax.rsqrt(var + eps) * gamma + beta


def _gelu_tanh(x):
    # TODO(synk): exact-erf GELU if bit-matching torch's default is required.
    c = math.sqrt(2.0 / math.pi)
    return 0.5 * x * (1.0 + jnp.tanh(c * (x + 0.044715 * x * x * x)))


# ----------------------------- per-layer kernel (grid = (batch, layer)) -----------------------------
def bert_layer_kernel(x_ref,
                      wqkv_ref, bqkv_ref, wo_ref, bo_ref,
                      ln1g_ref, ln1b_ref,
                      w1_ref, b1_ref, w2_ref, b2_ref,
                      ln2g_ref, ln2b_ref,
                      outg_ref, outb_ref,
                      o_ref,
                      x_scr,
                      *, num_heads, eps):
    l = pl.program_id(1)

    # Layer 0: pull this batch element's activations into the resident VMEM residual scratch.
    @pl.when(l == 0)
    def _():
        x_scr[...] = x_ref[...].astype(jnp.float32)

    x = x_scr[...]                                   # (S, D) f32 residual stream
    S, D = x.shape
    hd = D // num_heads

    # ---- multi-head self-attention (post-LN: x = LN1(x + Attn(x))) ----
    xb = x.astype(jnp.bfloat16)
    # one lane-dense K=D matmul for Q|K|V (1/sqrt(hd) already folded into the Q columns)
    qkv = jnp.dot(xb, wqkv_ref[...],
                  preferred_element_type=jnp.float32) + bqkv_ref[...]          # (S, 3D) f32

    def split_heads(off):
        # static lane slices stacked onto a leading batch axis (no 3H activation replication)
        return jnp.stack(
            [qkv[:, off + h * hd: off + (h + 1) * hd] for h in range(num_heads)], axis=0)

    q = split_heads(0).astype(jnp.bfloat16)          # (H, S, hd)
    k = split_heads(D).astype(jnp.bfloat16)
    v = split_heads(2 * D).astype(jnp.bfloat16)

    s = jnp.einsum('hqc,hkc->hqk', q, k, preferred_element_type=jnp.float32)   # (H, S, S)
    # batched softmax over all heads, f32 math, EUP reciprocal
    s = s - jnp.max(s, axis=-1, keepdims=True)
    p = jnp.exp(s)
    p = p * pl.reciprocal(jnp.sum(p, axis=-1, keepdims=True), approx=True)

    ctx = jnp.einsum('hqk,hkc->hqc', p.astype(jnp.bfloat16), v,
                     preferred_element_type=jnp.float32)                       # (H, S, hd)
    # concat heads back onto the lane axis -> single K=D output projection
    ctx2 = jnp.concatenate([ctx[h] for h in range(num_heads)],
                           axis=-1).astype(jnp.bfloat16)                       # (S, D)
    attn = jnp.dot(ctx2, wo_ref[...], preferred_element_type=jnp.float32) + bo_ref[...]

    x = _layernorm(x + attn, ln1g_ref[...], ln1b_ref[...], eps)

    # ---- MLP (post-LN: x = LN2(x + MLP(x))) ----
    h = jnp.dot(x.astype(jnp.bfloat16), w1_ref[...],
                preferred_element_type=jnp.float32) + b1_ref[...]              # (S, F)
    h = _gelu_tanh(h)                                                          # f32 tanh -> EUP
    h = jnp.dot(h.astype(jnp.bfloat16), w2_ref[...],
                preferred_element_type=jnp.float32) + b2_ref[...]              # (S, D)
    x = _layernorm(x + h, ln2g_ref[...], ln2b_ref[...], eps)

    x_scr[...] = x

    # Last layer: final out-LayerNorm, write the output block (resident across the L axis).
    @pl.when(l == pl.num_programs(1) - 1)
    def _():
        o_ref[...] = _layernorm(x, outg_ref[...], outb_ref[...], eps).astype(o_ref.dtype)


# ----------------------------- pallas_call wrapper -----------------------------
def run_bert_encoder(x, params):
    B, S, D = x.shape
    F = FFN_DIM
    p = params

    def lspec(*shape):
        # per-layer weight block: streamed (auto double-buffered) along the L grid axis
        nz = (0,) * len(shape)
        return pl.BlockSpec((None,) + tuple(shape), lambda b, l, nz=nz: (l,) + nz)

    in_specs = [
        pl.BlockSpec((None, S, D), lambda b, l: (b, 0, 0)),   # x: per batch element, const over L
        lspec(D, 3 * D),          # wqkv  (fused, scale folded into Q)
        lspec(1, 3 * D),          # bqkv  (lane-dense)
        lspec(D, D),              # wo
        lspec(1, D),              # bo
        lspec(1, D), lspec(1, D),              # ln1 gamma/beta
        lspec(D, F), lspec(1, F),              # w1, b1
        lspec(F, D), lspec(1, D),              # w2, b2
        lspec(1, D), lspec(1, D),              # ln2 gamma/beta
        pl.BlockSpec((1, D), lambda b, l: (0, 0)),            # out_norm gamma
        pl.BlockSpec((1, D), lambda b, l: (0, 0)),            # out_norm beta
    ]

    args = (x,
            p["wqkv"], p["bqkv"], p["wo"], p["bo"],
            p["ln1_g"], p["ln1_b"],
            p["w1"], p["b1"], p["w2"], p["b2"],
            p["ln2_g"], p["ln2_b"],
            p["out_g"], p["out_b"])

    return pl.pallas_call(
        partial(bert_layer_kernel, num_heads=NUM_HEADS, eps=LN_EPS),
        grid=(B, NUM_LAYERS),
        out_shape=jax.ShapeDtypeStruct((B, S, D), jnp.float32),
        in_specs=in_specs,
        out_specs=pl.BlockSpec((None, S, D), lambda b, l: (b, 0, 0)),
        scratch_shapes=[pltpu.VMEM((S, D), jnp.float32)],     # residual stream, carried across L
        compiler_params=pltpu.CompilerParams(
            dimension_semantics=("parallel", "arbitrary"),    # batch -> both TCs on v7x; L streamed
            vmem_limit_bytes=32 * 1024 * 1024),
    )(*args)


# ----------------------------- parameter construction (deterministic) -----------------------------
def init_params(key):
    L, H, D, F, hd = NUM_LAYERS, NUM_HEADS, MODEL_DIM, FFN_DIM, HEAD_DIM

    def normal(k, shape, std=0.02):
        return (std * jax.random.normal(k, shape)).astype(jnp.float32)

    keys = jax.random.split(key, 8)
    wte = normal(keys[0], (VOCAB_SIZE, D))
    wpe = normal(keys[1], (MAX_POS, D))

    wq = normal(keys[2], (L, D, D))
    wk = normal(keys[3], (L, D, D))
    wv = normal(keys[4], (L, D, D))
    wo = normal(keys[5], (L, D, D))
    w1 = normal(keys[6], (L, D, F))
    w2 = normal(keys[7], (L, F, D))

    # Host-side fused QKV layout (x @ W convention, columns = outputs); attention scale folded
    # into the Q columns so the kernel never multiplies the (H,S,S) score tensor by 1/sqrt(hd).
    scale = 1.0 / math.sqrt(hd)
    wqkv = jnp.concatenate([wq * scale, wk, wv], axis=-1).astype(jnp.bfloat16)   # (L, D, 3D)
    bqkv = jnp.zeros((L, 1, 3 * D), jnp.float32)                                  # Q part pre-scaled (zero here)

    return {
        "wte": wte, "wpe": wpe,
        "wqkv": wqkv,
        "bqkv": bqkv,
        "wo": wo.astype(jnp.bfloat16),                 # (L, D, D)
        "bo": jnp.zeros((L, 1, D), jnp.float32),
        "ln1_g": jnp.ones((L, 1, D), jnp.float32),
        "ln1_b": jnp.zeros((L, 1, D), jnp.float32),
        "w1": w1.astype(jnp.bfloat16),
        "b1": jnp.zeros((L, 1, F), jnp.float32),
        "w2": w2.astype(jnp.bfloat16),
        "b2": jnp.zeros((L, 1, D), jnp.float32),
        "ln2_g": jnp.ones((L, 1, D), jnp.float32),
        "ln2_b": jnp.zeros((L, 1, D), jnp.float32),
        "out_g": jnp.ones((1, D), jnp.float32),
        "out_b": jnp.zeros((1, D), jnp.float32),
    }


# ----------------------------- full forward -----------------------------
def bert_forward(id_input, params):
    """id_input: int32 [B, S] token ids -> float32 [B, S, D] representation."""
    B, S = id_input.shape
    assert S <= MAX_POS
    # embedding (plain-JAX gather glue); embedding dropout = identity (eval mode)
    tok = jnp.take(params["wte"], id_input, axis=0)                    # (B, S, D)
    pos = params["wpe"][:S][None, :, :]                                # (1, S, D)
    x = (tok + pos).astype(jnp.float32)
    # single Pallas kernel: all transformer layers (streamed along grid) + final out-LayerNorm
    return run_bert_encoder(x, params)


# ----------------------------- main -----------------------------
if __name__ == "__main__":
    key = jax.random.PRNGKey(0)
    pkey, ikey = jax.random.split(key)
    params = init_params(pkey)

    ids = jax.random.randint(ikey, (BATCH, SEQ_LEN), 0, VOCAB_SIZE, dtype=jnp.int32)

    out = jax.block_until_ready(bert_forward(ids, params))

    assert out.shape == (BATCH, SEQ_LEN, MODEL_DIM)
    assert out.dtype == jnp.float32
    assert bool(jnp.all(jnp.isfinite(out)))
    print("KERNEL_OK")
</pallas_src>

<mosaic_0001>
module attributes {stable_mosaic.version = 11 : i64} {
  func.func @bert_layer_kernel(%arg0: i32, %arg1: i32, %arg2: memref<1x8x32xf32, #tpu.memory_space<vmem>>, %arg3: memref<1x32x96xbf16, #tpu.memory_space<vmem>>, %arg4: memref<1x1x96xf32, #tpu.memory_space<vmem>>, %arg5: memref<1x32x32xbf16, #tpu.memory_space<vmem>>, %arg6: memref<1x1x32xf32, #tpu.memory_space<vmem>>, %arg7: memref<1x1x32xf32, #tpu.memory_space<vmem>>, %arg8: memref<1x1x32xf32, #tpu.memory_space<vmem>>, %arg9: memref<1x32x128xbf16, #tpu.memory_space<vmem>>, %arg10: memref<1x1x128xf32, #tpu.memory_space<vmem>>, %arg11: memref<1x128x32xbf16, #tpu.memory_space<vmem>>, %arg12: memref<1x1x32xf32, #tpu.memory_space<vmem>>, %arg13: memref<1x1x32xf32, #tpu.memory_space<vmem>>, %arg14: memref<1x1x32xf32, #tpu.memory_space<vmem>>, %arg15: memref<1x32xf32, #tpu.memory_space<vmem>>, %arg16: memref<1x32xf32, #tpu.memory_space<vmem>>, %arg17: memref<1x8x32xf32, #tpu.memory_space<vmem>>, %arg18: memref<8x32xf32, #tpu.memory_space<vmem>>) attributes {dimension_semantics = [#tpu.dimension_semantics<parallel>, #tpu.dimension_semantics<arbitrary>], iteration_bounds = array<i64: 2, 2>, scalar_prefetch = 0 : i64, scratch_operands = 1 : i64, tpu.core_type = #tpu.core_type<tc>, window_params = [{transform_indices = @transform_0, window_bounds = array<i64: 1, 8, 32>}, {transform_indices = @transform_1, window_bounds = array<i64: 1, 32, 96>}, {transform_indices = @transform_2, window_bounds = array<i64: 1, 1, 96>}, {transform_indices = @transform_3, window_bounds = array<i64: 1, 32, 32>}, {transform_indices = @transform_4, window_bounds = array<i64: 1, 1, 32>}, {transform_indices = @transform_5, window_bounds = array<i64: 1, 1, 32>}, {transform_indices = @transform_6, window_bounds = array<i64: 1, 1, 32>}, {transform_indices = @transform_7, window_bounds = array<i64: 1, 32, 128>}, {transform_indices = @transform_8, window_bounds = array<i64: 1, 1, 128>}, {transform_indices = @transform_9, window_bounds = array<i64: 1, 128, 32>}, {transform_indices = @transform_10, window_bounds = array<i64: 1, 1, 32>}, {transform_indices = @transform_11, window_bounds = array<i64: 1, 1, 32>}, {transform_indices = @transform_12, window_bounds = array<i64: 1, 1, 32>}, {pipeline_mode = #tpu.pipeline_mode<synchronous>, transform_indices = @transform_13, window_bounds = array<i64: 1, 32>}, {pipeline_mode = #tpu.pipeline_mode<synchronous>, transform_indices = @transform_14, window_bounds = array<i64: 1, 32>}, {transform_indices = @transform_15, window_bounds = array<i64: 1, 8, 32>}]} {
    %c0_i32 = arith.constant 0 : i32
    %0 = arith.cmpi eq, %arg1, %c0_i32 : i32
    %1 = arith.extui %0 : i1 to i32
    %c0_i32_0 = arith.constant 0 : i32
    %2 = arith.cmpi ne, %1, %c0_i32_0 : i32
    scf.if %2 {
      %c0_62 = arith.constant 0 : index
      %c0_63 = arith.constant 0 : index
      %c0_64 = arith.constant 0 : index
      %159 = vector.load %arg2[%c0_62, %c0_63, %c0_64] : memref<1x8x32xf32, #tpu.memory_space<vmem>>, vector<1x8x32xf32>
      %160 = vector.shape_cast %159 : vector<1x8x32xf32> to vector<8x32xf32>
      %c0_65 = arith.constant 0 : index
      %c0_66 = arith.constant 0 : index
      %161 = vector.load %arg18[%c0_65, %c0_66] : memref<8x32xf32, #tpu.memory_space<vmem>>, vector<8x32xf32>
      tpu.vector_store %arg18[%c0_65, %c0_66], %160 {strides = array<i32>} : memref<8x32xf32, #tpu.memory_space<vmem>>, vector<8x32xf32>,
    } else {
    }
    %c0 = arith.constant 0 : index
    %c0_1 = arith.constant 0 : index
    %3 = vector.load %arg18[%c0, %c0_1] : memref<8x32xf32, #tpu.memory_space<vmem>>, vector<8x32xf32>
    %4 = arith.truncf %3 : vector<8x32xf32> to vector<8x32xbf16>
    %c0_2 = arith.constant 0 : index
    %c0_3 = arith.constant 0 : index
    %c0_4 = arith.constant 0 : index
    %5 = vector.load %arg3[%c0_2, %c0_3, %c0_4] : memref<1x32x96xbf16, #tpu.memory_space<vmem>>, vector<1x32x96xbf16>
    %6 = vector.shape_cast %5 : vector<1x32x96xbf16> to vector<32x96xbf16>
    %cst = arith.constant dense<0.000000e+00> : vector<8x96xf32>
    %7 = tpu.matmul %4, %6, %cst {dimension_numbers = #tpu.dot_dimension_numbers<[1], [0], [0], [1], [0, 0, 1, 1], [], []>} : vector<8x32xbf16>, vector<32x96xbf16>, vector<8x96xf32> -> vector<8x96xf32>
    %c0_5 = arith.constant 0 : index
    %c0_6 = arith.constant 0 : index
    %c0_7 = arith.constant 0 : index
    %8 = vector.load %arg4[%c0_5, %c0_6, %c0_7] : memref<1x1x96xf32, #tpu.memory_space<vmem>>, vector<1x1x96xf32>
    %9 = vector.shape_cast %8 : vector<1x1x96xf32> to vector<1x96xf32>
    %10 = vector.broadcast %9 : vector<1x96xf32> to vector<8x96xf32>
    %11 = arith.addf %7, %10 : vector<8x96xf32>
    %12 = vector.extract_strided_slice %11 {offsets = [0, 0], sizes = [8, 8], strides = [1, 1]} : vector<8x96xf32> to vector<8x8xf32>
    %13 = vector.extract_strided_slice %11 {offsets = [0, 8], sizes = [8, 8], strides = [1, 1]} : vector<8x96xf32> to vector<8x8xf32>
    %14 = vector.extract_strided_slice %11 {offsets = [0, 16], sizes = [8, 8], strides = [1, 1]} : vector<8x96xf32> to vector<8x8xf32>
    %15 = vector.extract_strided_slice %11 {offsets = [0, 24], sizes = [8, 8], strides = [1, 1]} : vector<8x96xf32> to vector<8x8xf32>
    %16 = vector.shape_cast %12 : vector<8x8xf32> to vector<1x8x8xf32>
    %17 = vector.shape_cast %13 : vector<8x8xf32> to vector<1x8x8xf32>
    %18 = vector.shape_cast %14 : vector<8x8xf32> to vector<1x8x8xf32>
    %19 = vector.shape_cast %15 : vector<8x8xf32> to vector<1x8x8xf32>
    %20 = tpu.concatenate %16, %17, %18, %19 in 0 : vector<1x8x8xf32>, vector<1x8x8xf32>, vector<1x8x8xf32>, vector<1x8x8xf32> -> vector<4x8x8xf32>
    %21 = arith.truncf %20 : vector<4x8x8xf32> to vector<4x8x8xbf16>
    %22 = vector.extract_strided_slice %11 {offsets = [0, 32], sizes = [8, 8], strides = [1, 1]} : vector<8x96xf32> to vector<8x8xf32>
    %23 = vector.extract_strided_slice %11 {offsets = [0, 40], sizes = [8, 8], strides = [1, 1]} : vector<8x96xf32> to vector<8x8xf32>
    %24 = vector.extract_strided_slice %11 {offsets = [0, 48], sizes = [8, 8], strides = [1, 1]} : vector<8x96xf32> to vector<8x8xf32>
    %25 = vector.extract_strided_slice %11 {offsets = [0, 56], sizes = [8, 8], strides = [1, 1]} : vector<8x96xf32> to vector<8x8xf32>
    %26 = vector.shape_cast %22 : vector<8x8xf32> to vector<1x8x8xf32>
    %27 = vector.shape_cast %23 : vector<8x8xf32> to vector<1x8x8xf32>
    %28 = vector.shape_cast %24 : vector<8x8xf32> to vector<1x8x8xf32>
    %29 = vector.shape_cast %25 : vector<8x8xf32> to vector<1x8x8xf32>
    %30 = tpu.concatenate %26, %27, %28, %29 in 0 : vector<1x8x8xf32>, vector<1x8x8xf32>, vector<1x8x8xf32>, vector<1x8x8xf32> -> vector<4x8x8xf32>
    %31 = arith.truncf %30 : vector<4x8x8xf32> to vector<4x8x8xbf16>
    %32 = vector.extract_strided_slice %11 {offsets = [0, 64], sizes = [8, 8], strides = [1, 1]} : vector<8x96xf32> to vector<8x8xf32>
    %33 = vector.extract_strided_slice %11 {offsets = [0, 72], sizes = [8, 8], strides = [1, 1]} : vector<8x96xf32> to vector<8x8xf32>
    %34 = vector.extract_strided_slice %11 {offsets = [0, 80], sizes = [8, 8], strides = [1, 1]} : vector<8x96xf32> to vector<8x8xf32>
    %35 = vector.extract_strided_slice %11 {offsets = [0, 88], sizes = [8, 8], strides = [1, 1]} : vector<8x96xf32> to vector<8x8xf32>
    %36 = vector.shape_cast %32 : vector<8x8xf32> to vector<1x8x8xf32>
    %37 = vector.shape_cast %33 : vector<8x8xf32> to vector<1x8x8xf32>
    %38 = vector.shape_cast %34 : vector<8x8xf32> to vector<1x8x8xf32>
    %39 = vector.shape_cast %35 : vector<8x8xf32> to vector<1x8x8xf32>
    %40 = tpu.concatenate %36, %37, %38, %39 in 0 : vector<1x8x8xf32>, vector<1x8x8xf32>, vector<1x8x8xf32>, vector<1x8x8xf32> -> vector<4x8x8xf32>
    %41 = arith.truncf %40 : vector<4x8x8xf32> to vector<4x8x8xbf16>
    "tpu.trace_start"() <{level = 10 : i32, message = "hqc,hkc->hqk"}> : () -> ()
    %cst_8 = arith.constant dense<0.000000e+00> : vector<4x8x8xf32>
    %42 = tpu.matmul %21, %31, %cst_8 {dimension_numbers = #tpu.dot_dimension_numbers<[2], [2], [1], [1], [0, 0, 0, 1, 1, 1], [0], [0]>} : vector<4x8x8xbf16>, vector<4x8x8xbf16>, vector<4x8x8xf32> -> vector<4x8x8xf32>
    "tpu.trace_stop"() : () -> ()
    %cst_9 = arith.constant dense<0xFF800000> : vector<4x8xf32>
    %43 = vector.multi_reduction <maximumf>, %42, %cst_9 [2] : vector<4x8x8xf32> to vector<4x8xf32>
    %44 = vector.shape_cast %43 : vector<4x8xf32> to vector<4x8x1xf32>
    %45 = vector.broadcast %44 : vector<4x8x1xf32> to vector<4x8x8xf32>
    %46 = arith.subf %42, %45 : vector<4x8x8xf32>
    %47 = math.exp %46 : vector<4x8x8xf32>
    %cst_10 = arith.constant dense<0.000000e+00> : vector<4x8xf32>
    %48 = vector.multi_reduction <add>, %47, %cst_10 [2] : vector<4x8x8xf32> to vector<4x8xf32>
    %49 = vector.shape_cast %48 : vector<4x8xf32> to vector<4x8x1xf32>
    %50 = tpu.reciprocal %49 {approx = true} : vector<4x8x1xf32> -> vector<4x8x1xf32>
    %51 = vector.broadcast %50 : vector<4x8x1xf32> to vector<4x8x8xf32>
    %52 = arith.mulf %47, %51 : vector<4x8x8xf32>
    %53 = arith.truncf %52 : vector<4x8x8xf32> to vector<4x8x8xbf16>
    "tpu.trace_start"() <{level = 10 : i32, message = "hqk,hkc->hqc"}> : () -> ()
    %cst_11 = arith.constant dense<0.000000e+00> : vector<4x8x8xf32>
    %54 = tpu.matmul %53, %41, %cst_11 {dimension_numbers = #tpu.dot_dimension_numbers<[2], [1], [1], [2], [0, 0, 0, 1, 1, 2], [0], [0]>} : vector<4x8x8xbf16>, vector<4x8x8xbf16>, vector<4x8x8xf32> -> vector<4x8x8xf32>
    "tpu.trace_stop"() : () -> ()
    %55 = vector.extract_strided_slice %54 {offsets = [0, 0, 0], sizes = [1, 8, 8], strides = [1, 1, 1]} : vector<4x8x8xf32> to vector<1x8x8xf32>
    %56 = vector.shape_cast %55 : vector<1x8x8xf32> to vector<8x8xf32>
    %57 = vector.extract_strided_slice %54 {offsets = [1, 0, 0], sizes = [1, 8, 8], strides = [1, 1, 1]} : vector<4x8x8xf32> to vector<1x8x8xf32>
    %58 = vector.shape_cast %57 : vector<1x8x8xf32> to vector<8x8xf32>
    %59 = vector.extract_strided_slice %54 {offsets = [2, 0, 0], sizes = [1, 8, 8], strides = [1, 1, 1]} : vector<4x8x8xf32> to vector<1x8x8xf32>
    %60 = vector.shape_cast %59 : vector<1x8x8xf32> to vector<8x8xf32>
    %61 = vector.extract_strided_slice %54 {offsets = [3, 0, 0], sizes = [1, 8, 8], strides = [1, 1, 1]} : vector<4x8x8xf32> to vector<1x8x8xf32>
    %62 = vector.shape_cast %61 : vector<1x8x8xf32> to vector<8x8xf32>
    %63 = tpu.concatenate %56, %58, %60, %62 in 1 : vector<8x8xf32>, vector<8x8xf32>, vector<8x8xf32>, vector<8x8xf32> -> vector<8x32xf32>
    %64 = arith.truncf %63 : vector<8x32xf32> to vector<8x32xbf16>
    %c0_12 = arith.constant 0 : index
    %c0_13 = arith.constant 0 : index
    %c0_14 = arith.constant 0 : index
    %65 = vector.load %arg5[%c0_12, %c0_13, %c0_14] : memref<1x32x32xbf16, #tpu.memory_space<vmem>>, vector<1x32x32xbf16>
    %66 = vector.shape_cast %65 : vector<1x32x32xbf16> to vector<32x32xbf16>
    %cst_15 = arith.constant dense<0.000000e+00> : vector<8x32xf32>
    %67 = tpu.matmul %64, %66, %cst_15 {dimension_numbers = #tpu.dot_dimension_numbers<[1], [0], [0], [1], [0, 0, 1, 1], [], []>} : vector<8x32xbf16>, vector<32x32xbf16>, vector<8x32xf32> -> vector<8x32xf32>
    %c0_16 = arith.constant 0 : index
    %c0_17 = arith.constant 0 : index
    %c0_18 = arith.constant 0 : index
    %68 = vector.load %arg6[%c0_16, %c0_17, %c0_18] : memref<1x1x32xf32, #tpu.memory_space<vmem>>, vector<1x1x32xf32>
    %69 = vector.shape_cast %68 : vector<1x1x32xf32> to vector<1x32xf32>
    %70 = vector.broadcast %69 : vector<1x32xf32> to vector<8x32xf32>
    %71 = arith.addf %67, %70 : vector<8x32xf32>
    %72 = arith.addf %3, %71 : vector<8x32xf32>
    %c0_19 = arith.constant 0 : index
    %c0_20 = arith.constant 0 : index
    %c0_21 = arith.constant 0 : index
    %73 = vector.load %arg7[%c0_19, %c0_20, %c0_21] : memref<1x1x32xf32, #tpu.memory_space<vmem>>, vector<1x1x32xf32>
    %74 = vector.shape_cast %73 : vector<1x1x32xf32> to vector<1x32xf32>
    %c0_22 = arith.constant 0 : index
    %c0_23 = arith.constant 0 : index
    %c0_24 = arith.constant 0 : index
    %75 = vector.load %arg8[%c0_22, %c0_23, %c0_24] : memref<1x1x32xf32, #tpu.memory_space<vmem>>, vector<1x1x32xf32>
    %76 = vector.shape_cast %75 : vector<1x1x32xf32> to vector<1x32xf32>
    %cst_25 = arith.constant dense<0.000000e+00> : vector<8xf32>
    %77 = vector.multi_reduction <add>, %72, %cst_25 [1] : vector<8x32xf32> to vector<8xf32>
    %78 = vector.shape_cast %77 : vector<8xf32> to vector<8x1xf32>
    %cst_26 = arith.constant 3.200000e+01 : f32
    %79 = vector.broadcast %cst_26 : f32 to vector<8x1xf32>
    %80 = arith.divf %78, %79 : vector<8x1xf32>
    %81 = vector.broadcast %80 : vector<8x1xf32> to vector<8x32xf32>
    %82 = arith.subf %72, %81 : vector<8x32xf32>
    %83 = arith.mulf %82, %82 : vector<8x32xf32>
    %cst_27 = arith.constant dense<0.000000e+00> : vector<8xf32>
    %84 = vector.multi_reduction <add>, %83, %cst_27 [1] : vector<8x32xf32> to vector<8xf32>
    %85 = vector.shape_cast %84 : vector<8xf32> to vector<8x1xf32>
    %cst_28 = arith.constant 3.200000e+01 : f32
    %86 = vector.broadcast %cst_28 : f32 to vector<8x1xf32>
    %87 = arith.divf %85, %86 : vector<8x1xf32>
    %88 = vector.broadcast %80 : vector<8x1xf32> to vector<8x32xf32>
    %89 = arith.subf %72, %88 : vector<8x32xf32>
    %cst_29 = arith.constant 9.99999996E-13 : f32
    %90 = vector.broadcast %cst_29 : f32 to vector<8x1xf32>
    %91 = arith.addf %87, %90 : vector<8x1xf32>
    %92 = math.rsqrt %91 : vector<8x1xf32>
    %93 = vector.broadcast %92 : vector<8x1xf32> to vector<8x32xf32>
    %94 = arith.mulf %89, %93 : vector<8x32xf32>
    %95 = vector.broadcast %74 : vector<1x32xf32> to vector<8x32xf32>
    %96 = arith.mulf %94, %95 : vector<8x32xf32>
    %97 = vector.broadcast %76 : vector<1x32xf32> to vector<8x32xf32>
    %98 = arith.addf %96, %97 : vector<8x32xf32>
    %99 = arith.truncf %98 : vector<8x32xf32> to vector<8x32xbf16>
    %c0_30 = arith.constant 0 : index
    %c0_31 = arith.constant 0 : index
    %c0_32 = arith.constant 0 : index
    %100 = vector.load %arg9[%c0_30, %c0_31, %c0_32] : memref<1x32x128xbf16, #tpu.memory_space<vmem>>, vector<1x32x128xbf16>
    %101 = vector.shape_cast %100 : vector<1x32x128xbf16> to vector<32x128xbf16>
    %cst_33 = arith.constant dense<0.000000e+00> : vector<8x128xf32>
    %102 = tpu.matmul %99, %101, %cst_33 {dimension_numbers = #tpu.dot_dimension_numbers<[1], [0], [0], [1], [0, 0, 1, 1], [], []>} : vector<8x32xbf16>, vector<32x128xbf16>, vector<8x128xf32> -> vector<8x128xf32>
    %c0_34 = arith.constant 0 : index
    %c0_35 = arith.constant 0 : index
    %c0_36 = arith.constant 0 : index
    %103 = vector.load %arg10[%c0_34, %c0_35, %c0_36] : memref<1x1x128xf32, #tpu.memory_space<vmem>>, vector<1x1x128xf32>
    %104 = vector.shape_cast %103 : vector<1x1x128xf32> to vector<1x128xf32>
    %105 = vector.broadcast %104 : vector<1x128xf32> to vector<8x128xf32>
    %106 = arith.addf %102, %105 : vector<8x128xf32>
    %cst_37 = arith.constant 5.000000e-01 : f32
    %107 = vector.broadcast %cst_37 : f32 to vector<8x128xf32>
    %108 = arith.mulf %107, %106 : vector<8x128xf32>
    %cst_38 = arith.constant 4.471500e-02 : f32
    %109 = vector.broadcast %cst_38 : f32 to vector<8x128xf32>
    %110 = arith.mulf %109, %106 : vector<8x128xf32>
    %111 = arith.mulf %110, %106 : vector<8x128xf32>
    %112 = arith.mulf %111, %106 : vector<8x128xf32>
    %113 = arith.addf %106, %112 : vector<8x128xf32>
    %cst_39 = arith.constant 0.797884583 : f32
    %114 = vector.broadcast %cst_39 : f32 to vector<8x128xf32>
    %115 = arith.mulf %114, %113 : vector<8x128xf32>
    %116 = math.tanh %115 : vector<8x128xf32>
    %cst_40 = arith.constant 1.000000e+00 : f32
    %117 = vector.broadcast %cst_40 : f32 to vector<8x128xf32>
    %118 = arith.addf %117, %116 : vector<8x128xf32>
    %119 = arith.mulf %108, %118 : vector<8x128xf32>
    %120 = arith.truncf %119 : vector<8x128xf32> to vector<8x128xbf16>
    %c0_41 = arith.constant 0 : index
    %c0_42 = arith.constant 0 : index
    %c0_43 = arith.constant 0 : index
    %121 = vector.load %arg11[%c0_41, %c0_42, %c0_43] : memref<1x128x32xbf16, #tpu.memory_space<vmem>>, vector<1x128x32xbf16>
    %122 = vector.shape_cast %121 : vector<1x128x32xbf16> to vector<128x32xbf16>
    %cst_44 = arith.constant dense<0.000000e+00> : vector<8x32xf32>
    %123 = tpu.matmul %120, %122, %cst_44 {dimension_numbers = #tpu.dot_dimension_numbers<[1], [0], [0], [1], [0, 0, 1, 1], [], []>} : vector<8x128xbf16>, vector<128x32xbf16>, vector<8x32xf32> -> vector<8x32xf32>
    %c0_45 = arith.constant 0 : index
    %c0_46 = arith.constant 0 : index
    %c0_47 = arith.constant 0 : index
    %124 = vector.load %arg12[%c0_45, %c0_46, %c0_47] : memref<1x1x32xf32, #tpu.memory_space<vmem>>, vector<1x1x32xf32>
    %125 = vector.shape_cast %124 : vector<1x1x32xf32> to vector<1x32xf32>
    %126 = vector.broadcast %125 : vector<1x32xf32> to vector<8x32xf32>
    %127 = arith.addf %123, %126 : vector<8x32xf32>
    %128 = arith.addf %98, %127 : vector<8x32xf32>
    %c0_48 = arith.constant 0 : index
    %c0_49 = arith.constant 0 : index
    %c0_50 = arith.constant 0 : index
    %129 = vector.load %arg13[%c0_48, %c0_49, %c0_50] : memref<1x1x32xf32, #tpu.memory_space<vmem>>, vector<1x1x32xf32>
    %130 = vector.shape_cast %129 : vector<1x1x32xf32> to vector<1x32xf32>
    %c0_51 = arith.constant 0 : index
    %c0_52 = arith.constant 0 : index
    %c0_53 = arith.constant 0 : index
    %131 = vector.load %arg14[%c0_51, %c0_52, %c0_53] : memref<1x1x32xf32, #tpu.memory_space<vmem>>, vector<1x1x32xf32>
    %132 = vector.shape_cast %131 : vector<1x1x32xf32> to vector<1x32xf32>
    %cst_54 = arith.constant dense<0.000000e+00> : vector<8xf32>
    %133 = vector.multi_reduction <add>, %128, %cst_54 [1] : vector<8x32xf32> to vector<8xf32>
    %134 = vector.shape_cast %133 : vector<8xf32> to vector<8x1xf32>
    %cst_55 = arith.constant 3.200000e+01 : f32
    %135 = vector.broadcast %cst_55 : f32 to vector<8x1xf32>
    %136 = arith.divf %134, %135 : vector<8x1xf32>
    %137 = vector.broadcast %136 : vector<8x1xf32> to vector<8x32xf32>
    %138 = arith.subf %128, %137 : vector<8x32xf32>
    %139 = arith.mulf %138, %138 : vector<8x32xf32>
    %cst_56 = arith.constant dense<0.000000e+00> : vector<8xf32>
    %140 = vector.multi_reduction <add>, %139, %cst_56 [1] : vector<8x32xf32> to vector<8xf32>
    %141 = vector.shape_cast %140 : vector<8xf32> to vector<8x1xf32>
    %cst_57 = arith.constant 3.200000e+01 : f32
    %142 = vector.broadcast %cst_57 : f32 to vector<8x1xf32>
    %143 = arith.divf %141, %142 : vector<8x1xf32>
    %144 = vector.broadcast %136 : vector<8x1xf32> to vector<8x32xf32>
    %145 = arith.subf %128, %144 : vector<8x32xf32>
    %cst_58 = arith.constant 9.99999996E-13 : f32
    %146 = vector.broadcast %cst_58 : f32 to vector<8x1xf32>
    %147 = arith.addf %143, %146 : vector<8x1xf32>
    %148 = math.rsqrt %147 : vector<8x1xf32>
    %149 = vector.broadcast %148 : vector<8x1xf32> to vector<8x32xf32>
    %150 = arith.mulf %145, %149 : vector<8x32xf32>
    %151 = vector.broadcast %130 : vector<1x32xf32> to vector<8x32xf32>
    %152 = arith.mulf %150, %151 : vector<8x32xf32>
    %153 = vector.broadcast %132 : vector<1x32xf32> to vector<8x32xf32>
    %154 = arith.addf %152, %153 : vector<8x32xf32>
    %c0_59 = arith.constant 0 : index
    %c0_60 = arith.constant 0 : index
    %155 = vector.load %arg18[%c0_59, %c0_60] : memref<8x32xf32, #tpu.memory_space<vmem>>, vector<8x32xf32>
    tpu.vector_store %arg18[%c0_59, %c0_60], %154 {strides = array<i32>} : memref<8x32xf32, #tpu.memory_space<vmem>>, vector<8x32xf32>,
    %c1_i32 = arith.constant 1 : i32
    %156 = arith.cmpi eq, %arg1, %c1_i32 : i32
    %157 = arith.extui %156 : i1 to i32
    %c0_i32_61 = arith.constant 0 : i32
    %158 = arith.cmpi ne, %157, %c0_i32_61 : i32
    scf.if %158 {
      %c0_62 = arith.constant 0 : index
      %c0_63 = arith.constant 0 : index
      %159 = vector.load %arg15[%c0_62, %c0_63] : memref<1x32xf32, #tpu.memory_space<vmem>>, vector<1x32xf32>
      %c0_64 = arith.constant 0 : index
      %c0_65 = arith.constant 0 : index
      %160 = vector.load %arg16[%c0_64, %c0_65] : memref<1x32xf32, #tpu.memory_space<vmem>>, vector<1x32xf32>
      %cst_66 = arith.constant dense<0.000000e+00> : vector<8xf32>
      %161 = vector.multi_reduction <add>, %154, %cst_66 [1] : vector<8x32xf32> to vector<8xf32>
      %162 = vector.shape_cast %161 : vector<8xf32> to vector<8x1xf32>
      %cst_67 = arith.constant 3.200000e+01 : f32
      %163 = vector.broadcast %cst_67 : f32 to vector<8x1xf32>
      %164 = arith.divf %162, %163 : vector<8x1xf32>
      %165 = vector.broadcast %164 : vector<8x1xf32> to vector<8x32xf32>
      %166 = arith.subf %154, %165 : vector<8x32xf32>
      %167 = arith.mulf %166, %166 : vector<8x32xf32>
      %cst_68 = arith.constant dense<0.000000e+00> : vector<8xf32>
      %168 = vector.multi_reduction <add>, %167, %cst_68 [1] : vector<8x32xf32> to vector<8xf32>
      %169 = vector.shape_cast %168 : vector<8xf32> to vector<8x1xf32>
      %cst_69 = arith.constant 3.200000e+01 : f32
      %170 = vector.broadcast %cst_69 : f32 to vector<8x1xf32>
      %171 = arith.divf %169, %170 : vector<8x1xf32>
      %172 = vector.broadcast %164 : vector<8x1xf32> to vector<8x32xf32>
      %173 = arith.subf %154, %172 : vector<8x32xf32>
      %cst_70 = arith.constant 9.99999996E-13 : f32
      %174 = vector.broadcast %cst_70 : f32 to vector<8x1xf32>
      %175 = arith.addf %171, %174 : vector<8x1xf32>
      %176 = math.rsqrt %175 : vector<8x1xf32>
      %177 = vector.broadcast %176 : vector<8x1xf32> to vector<8x32xf32>
      %178 = arith.mulf %173, %177 : vector<8x32xf32>
      %179 = vector.broadcast %159 : vector<1x32xf32> to vector<8x32xf32>
      %180 = arith.mulf %178, %179 : vector<8x32xf32>
      %181 = vector.broadcast %160 : vector<1x32xf32> to vector<8x32xf32>
      %182 = arith.addf %180, %181 : vector<8x32xf32>
      %c0_71 = arith.constant 0 : index
      %c0_72 = arith.constant 0 : index
      %c0_73 = arith.constant 0 : index
      %183 = vector.load %arg17[%c0_71, %c0_72, %c0_73] : memref<1x8x32xf32, #tpu.memory_space<vmem>>, vector<1x8x32xf32>
      %184 = vector.shape_cast %183 : vector<1x8x32xf32> to vector<8x32xf32>
      %185 = vector.shape_cast %182 : vector<8x32xf32> to vector<1x8x32xf32>
      tpu.vector_store %arg17[%c0_71, %c0_72, %c0_73], %185 {strides = array<i32>} : memref<1x8x32xf32, #tpu.memory_space<vmem>>, vector<1x8x32xf32>,
    } else {
    }
    return
  }
  func.func @transform_0(%arg0: i32, %arg1: i32) -> (i32, i32, i32) {
    %c0_i32 = arith.constant 0 : i32
    %c0_i32_0 = arith.constant 0 : i32
    %c0_i32_1 = arith.constant 0 : i32
    return %arg0, %c0_i32, %c0_i32_0 : i32, i32, i32
  }
  func.func @transform_1(%arg0: i32, %arg1: i32) -> (i32, i32, i32) {
    %c0_i32 = arith.constant 0 : i32
    %c0_i32_0 = arith.constant 0 : i32
    %c0_i32_1 = arith.constant 0 : i32
    return %arg1, %c0_i32, %c0_i32_0 : i32, i32, i32
  }
  func.func @transform_2(%arg0: i32, %arg1: i32) -> (i32, i32, i32) {
    %c0_i32 = arith.constant 0 : i32
    %c0_i32_0 = arith.constant 0 : i32
    %c0_i32_1 = arith.constant 0 : i32
    return %arg1, %c0_i32, %c0_i32_0 : i32, i32, i32
  }
  func.func @transform_3(%arg0: i32, %arg1: i32) -> (i32, i32, i32) {
    %c0_i32 = arith.constant 0 : i32
    %c0_i32_0 = arith.constant 0 : i32
    %c0_i32_1 = arith.constant 0 : i32
    return %arg1, %c0_i32, %c0_i32_0 : i32, i32, i32
  }
  func.func @transform_4(%arg0: i32, %arg1: i32) -> (i32, i32, i32) {
    %c0_i32 = arith.constant 0 : i32
    %c0_i32_0 = arith.constant 0 : i32
    %c0_i32_1 = arith.constant 0 : i32
    return %arg1, %c0_i32, %c0_i32_0 : i32, i32, i32
  }
  func.func @transform_5(%arg0: i32, %arg1: i32) -> (i32, i32, i32) {
    %c0_i32 = arith.constant 0 : i32
    %c0_i32_0 = arith.constant 0 : i32
    %c0_i32_1 = arith.constant 0 : i32
    return %arg1, %c0_i32, %c0_i32_0 : i32, i32, i32
  }
  func.func @transform_6(%arg0: i32, %arg1: i32) -> (i32, i32, i32) {
    %c0_i32 = arith.constant 0 : i32
    %c0_i32_0 = arith.constant 0 : i32
    %c0_i32_1 = arith.constant 0 : i32
    return %arg1, %c0_i32, %c0_i32_0 : i32, i32, i32
  }
  func.func @transform_7(%arg0: i32, %arg1: i32) -> (i32, i32, i32) {
    %c0_i32 = arith.constant 0 : i32
    %c0_i32_0 = arith.constant 0 : i32
    %c0_i32_1 = arith.constant 0 : i32
    return %arg1, %c0_i32, %c0_i32_0 : i32, i32, i32
  }
  func.func @transform_8(%arg0: i32, %arg1: i32) -> (i32, i32, i32) {
    %c0_i32 = arith.constant 0 : i32
    %c0_i32_0 = arith.constant 0 : i32
    %c0_i32_1 = arith.constant 0 : i32
    return %arg1, %c0_i32, %c0_i32_0 : i32, i32, i32
  }
  func.func @transform_9(%arg0: i32, %arg1: i32) -> (i32, i32, i32) {
    %c0_i32 = arith.constant 0 : i32
    %c0_i32_0 = arith.constant 0 : i32
    %c0_i32_1 = arith.constant 0 : i32
    return %arg1, %c0_i32, %c0_i32_0 : i32, i32, i32
  }
  func.func @transform_10(%arg0: i32, %arg1: i32) -> (i32, i32, i32) {
    %c0_i32 = arith.constant 0 : i32
    %c0_i32_0 = arith.constant 0 : i32
    %c0_i32_1 = arith.constant 0 : i32
    return %arg1, %c0_i32, %c0_i32_0 : i32, i32, i32
  }
  func.func @transform_11(%arg0: i32, %arg1: i32) -> (i32, i32, i32) {
    %c0_i32 = arith.constant 0 : i32
    %c0_i32_0 = arith.constant 0 : i32
    %c0_i32_1 = arith.constant 0 : i32
    return %arg1, %c0_i32, %c0_i32_0 : i32, i32, i32
  }
  func.func @transform_12(%arg0: i32, %arg1: i32) -> (i32, i32, i32) {
    %c0_i32 = arith.constant 0 : i32
    %c0_i32_0 = arith.constant 0 : i32
    %c0_i32_1 = arith.constant 0 : i32
    return %arg1, %c0_i32, %c0_i32_0 : i32, i32, i32
  }
  func.func @transform_13(%arg0: i32, %arg1: i32) -> (i32, i32) {
    %c0_i32 = arith.constant 0 : i32
    %c0_i32_0 = arith.constant 0 : i32
    %c0_i32_1 = arith.constant 0 : i32
    return %c0_i32, %c0_i32_0 : i32, i32
  }
  func.func @transform_14(%arg0: i32, %arg1: i32) -> (i32, i32) {
    %c0_i32 = arith.constant 0 : i32
    %c0_i32_0 = arith.constant 0 : i32
    %c0_i32_1 = arith.constant 0 : i32
    return %c0_i32, %c0_i32_0 : i32, i32
  }
  func.func @transform_15(%arg0: i32, %arg1: i32) -> (i32, i32, i32) {
    %c0_i32 = arith.constant 0 : i32
    %c0_i32_0 = arith.constant 0 : i32
    %c0_i32_1 = arith.constant 0 : i32
    return %arg0, %c0_i32, %c0_i32_0 : i32, i32, i32
  }
}

</mosaic_0001>

<llo_original>
// kernel: tpu_custom_call.1
$region0: #{tpu_custom_call.1}
  #allocation0 [shape = 'u32[]', space=smem, size = 0x4, offset = 0x4, fixed_abs, tag = 'smem constant byte address 0x4 - core index']
  #allocation1 [shape = 'u32[72,128]{1,0:T(1,128)}', space=vmem, size = 0x9000, scoped, tag = 'internal scratch']
  #allocation2 [shape = 'f32[8,32]{1,0:T(8,128)}', space=vmem, size = 0x1000, scoped, tag = 'scratch operand']
  %s0 = inlined_call_operand.vmem [shape: f32[2,8,32], index: 0, kind: input, shape index: {}]
  %s1 = inlined_call_operand.vmem [shape: bf16[2,32,96], index: 1, kind: input, shape index: {}]
  %s2 = inlined_call_operand.vmem [shape: f32[2,1,96], index: 2, kind: input, shape index: {}]
  %s3 = inlined_call_operand.vmem [shape: bf16[2,32,32], index: 3, kind: input, shape index: {}]
  %s4 = inlined_call_operand.vmem [shape: f32[2,1,32], index: 4, kind: input, shape index: {}]
  %s5 = inlined_call_operand.vmem [shape: f32[2,1,32], index: 5, kind: input, shape index: {}]
  %s6 = inlined_call_operand.vmem [shape: f32[2,1,32], index: 6, kind: input, shape index: {}]
  %s7 = inlined_call_operand.vmem [shape: bf16[2,32,128], index: 7, kind: input, shape index: {}]
  %s8 = inlined_call_operand.vmem [shape: f32[2,1,128], index: 8, kind: input, shape index: {}]
  %s9 = inlined_call_operand.vmem [shape: bf16[2,128,32], index: 9, kind: input, shape index: {}]
  %s10 = inlined_call_operand.vmem [shape: f32[2,1,32], index: 10, kind: input, shape index: {}]
  %s11 = inlined_call_operand.vmem [shape: f32[2,1,32], index: 11, kind: input, shape index: {}]
  %s12 = inlined_call_operand.vmem [shape: f32[2,1,32], index: 12, kind: input, shape index: {}]
  %s13 = inlined_call_operand.vmem [shape: f32[1,32], index: 13, kind: input, shape index: {}]
  %s14 = inlined_call_operand.vmem [shape: f32[1,32], index: 14, kind: input, shape index: {}]
  %s15 = inlined_call_operand.hbm [shape: f32[2,8,32], index: 15, kind: output, shape index: {}]
  %s16 = sld [smem:[#allocation0]]
  $region101: #{tpu_custom_call.1} parent=0
    _
  %s18 = ssub.s32 1, %s16
  %s19 = scalar_select 0, %s18, %s16
  $region1: #{tpu_custom_call.1} parent=0
    #allocation3 [shape = 'u8[8192]{0}', space=vmem, size = 0x2000, scoped, tag = 'output window, operand 0']
    #allocation4 [shape = 's32[2]{0}', space=sflag, size = 0x8, scoped, tag = 'scoped memory for tpu_custom_call.1']
    %20 = vsyncpa [#allocation4], 0
    %s21 = scalar_lea.sflag [#allocation4], 1
    %22 = vsyncpa %s21, 0
    loop: start=0, step=1, limit=6
    $region2: #{tpu_custom_call.1} parent=1 // loop_pre_header
      _
    $region3: #{tpu_custom_call.1} parent=1 // loop_header
      %s24 = sphi 0, %s28
      %p25 = scmp.ge.s32.totalorder %s24, 6
      %s31 = sphi 0, %s43
      %s32 = sphi 0, %s39
      %s33 = sphi 0, %s31
      %s34 = sphi 0, %s32
      %s35 = sphi 0, %s33
      %s36 = sphi 0, %s34
      %s46 = sphi 0, %s48
      %s49 = sphi 0, %s46
      %s50 = sphi 0, %s49
      %s66 = sphi 0, %s50
      %s72 = sphi 0, %s74
      %s75 = sphi 0, %s72
      %s76 = sphi 0, %s75
      %s92 = sphi 0, %s76
      %s98 = sphi 0, %s100
      %s101 = sphi 0, %s98
      %s102 = sphi 0, %s101
      %s118 = sphi 0, %s102
      %s124 = sphi 0, %s126
      %s127 = sphi 0, %s124
      %s128 = sphi 0, %s127
      %s144 = sphi 0, %s128
      %s150 = sphi 0, %s152
      %s153 = sphi 0, %s150
      %s154 = sphi 0, %s153
      %s170 = sphi 0, %s154
      %s176 = sphi 0, %s178
      %s179 = sphi 0, %s176
      %s180 = sphi 0, %s179
      %s196 = sphi 0, %s180
      %s202 = sphi 0, %s204
      %s205 = sphi 0, %s202
      %s206 = sphi 0, %s205
      %s222 = sphi 0, %s206
      %s228 = sphi 0, %s230
      %s231 = sphi 0, %s228
      %s232 = sphi 0, %s231
      %s248 = sphi 0, %s232
      %s254 = sphi 0, %s256
      %s257 = sphi 0, %s254
      %s258 = sphi 0, %s257
      %s274 = sphi 0, %s258
      %s280 = sphi 0, %s282
      %s283 = sphi 0, %s280
      %s284 = sphi 0, %s283
      %s300 = sphi 0, %s284
      %s306 = sphi 0, %s308
      %s309 = sphi 0, %s306
      %s310 = sphi 0, %s309
      %s326 = sphi 0, %s310
      %s332 = sphi 0, %s334
      %s335 = sphi 0, %s332
      %s336 = sphi 0, %s335
      %s352 = sphi 0, %s336
      %s358 = sphi 0, %s360
      %s361 = sphi 0, %s358
      %s362 = sphi 0, %s361
      %s378 = sphi 0, %s362
      %s382 = sphi 0, %s382
      %s384 = sphi 0, %s382
      %s385 = sphi 0, %s384
      %s399 = sphi 0, %s385
      %s403 = sphi 0, %s403
      %s405 = sphi 0, %s403
      %s406 = sphi 0, %s405
      %s420 = sphi 0, %s406
      %s426 = sphi 0, %s428
      %s429 = sphi 0, %s426
      %s430 = sphi 0, %s429
      %s446 = sphi 0, %s430
    $region4: #{tpu_custom_call.1} parent=1 // loop_header_branch
      %27 = sbr.rel (%p25) target = $region8
    $region5: #{tpu_custom_call.1} parent=1 // loop_body
      %s29 = ssub.s32 %s24, 1
      %s30 = ssub.s32 %s24, 2
      %s37 = sadd.s32 1, %s32
      %p38 = scmp.ge.s32.totalorder %s37, 2
      %s39 = scalar_select %p38, 0, %s37
      %s40 = sadd.s32 1, %s31
      %s41 = scalar_select %p38, %s40, %s31
      %p42 = scmp.ge.s32.totalorder %s41, 2
      %s43 = scalar_select %p42, 0, %s41
      %s44 = ssub.s32 %s31, %s43
      %p45 = scmp.eq.s32.totalorder %s44, 0
      %s47 = sadd.s32 %s46, 1
      %s48 = scalar_select %p45, %s46, %s47
      %p51 = pneg %p45
      %p52 = scmp.eq.s32.totalorder %s24, 3
      %p53 = por %p51, %p52
      %p54 = scmp.ne.s32.totalorder %s46, %s49
      %p55 = scmp.eq.s32.totalorder %s24, 0
      %p56 = por %p54, %p55
      %p57 = scmp.ne.s32.totalorder %s46, %s49
      %p58 = scmp.eq.s32.totalorder %s29, 3
      %p59 = por %p57, %p58
      %p60 = scmp.ne.s32.totalorder %s49, %s50
      %p61 = scmp.eq.s32.totalorder %s29, 0
      %p62 = por %p60, %p61
      %p63 = scmp.ne.s32.totalorder %s49, %s50
      %p64 = scmp.eq.s32.totalorder %s30, 3
      %p65 = por %p63, %p64
      %p67 = scmp.ne.s32.totalorder %s50, %s66
      %p68 = scmp.eq.s32.totalorder %s30, 0
      %p69 = por %p67, %p68
      %s70 = ssub.s32 %s32, %s39
      %p71 = scmp.eq.s32.totalorder %s70, 0
      %s73 = sadd.s32 %s72, 1
      %s74 = scalar_select %p71, %s72, %s73
      %p77 = pneg %p71
      %p78 = scmp.eq.s32.totalorder %s24, 3
      %p79 = por %p77, %p78
      %p80 = scmp.ne.s32.totalorder %s72, %s75
      %p81 = scmp.eq.s32.totalorder %s24, 0
      %p82 = por %p80, %p81
      %p83 = scmp.ne.s32.totalorder %s72, %s75
      %p84 = scmp.eq.s32.totalorder %s29, 3
      %p85 = por %p83, %p84
      %p86 = scmp.ne.s32.totalorder %s75, %s76
      %p87 = scmp.eq.s32.totalorder %s29, 0
      %p88 = por %p86, %p87
      %p89 = scmp.ne.s32.totalorder %s75, %s76
      %p90 = scmp.eq.s32.totalorder %s30, 3
      %p91 = por %p89, %p90
      %p93 = scmp.ne.s32.totalorder %s76, %s92
      %p94 = scmp.eq.s32.totalorder %s30, 0
      %p95 = por %p93, %p94
      %s96 = ssub.s32 %s32, %s39
      %p97 = scmp.eq.s32.totalorder %s96, 0
      %s99 = sadd.s32 %s98, 1
      %s100 = scalar_select %p97, %s98, %s99
      %p103 = pneg %p97
      %p104 = scmp.eq.s32.totalorder %s24, 3
      %p105 = por %p103, %p104
      %p106 = scmp.ne.s32.totalorder %s98, %s101
      %p107 = scmp.eq.s32.totalorder %s24, 0
      %p108 = por %p106, %p107
      %p109 = scmp.ne.s32.totalorder %s98, %s101
      %p110 = scmp.eq.s32.totalorder %s29, 3
      %p111 = por %p109, %p110
      %p112 = scmp.ne.s32.totalorder %s101, %s102
      %p113 = scmp.eq.s32.totalorder %s29, 0
      %p114 = por %p112, %p113
      %p115 = scmp.ne.s32.totalorder %s101, %s102
      %p116 = scmp.eq.s32.totalorder %s30, 3
      %p117 = por %p115, %p116
      %p119 = scmp.ne.s32.totalorder %s102, %s118
      %p120 = scmp.eq.s32.totalorder %s30, 0
      %p121 = por %p119, %p120
      %s122 = ssub.s32 %s32, %s39
      %p123 = scmp.eq.s32.totalorder %s122, 0
      %s125 = sadd.s32 %s124, 1
      %s126 = scalar_select %p123, %s124, %s125
      %p129 = pneg %p123
      %p130 = scmp.eq.s32.totalorder %s24, 3
      %p131 = por %p129, %p130
      %p132 = scmp.ne.s32.totalorder %s124, %s127
      %p133 = scmp.eq.s32.totalorder %s24, 0
      %p134 = por %p132, %p133
      %p135 = scmp.ne.s32.totalorder %s124, %s127
      %p136 = scmp.eq.s32.totalorder %s29, 3
      %p137 = por %p135, %p136
      %p138 = scmp.ne.s32.totalorder %s127, %s128
      %p139 = scmp.eq.s32.totalorder %s29, 0
      %p140 = por %p138, %p139
      %p141 = scmp.ne.s32.totalorder %s127, %s128
      %p142 = scmp.eq.s32.totalorder %s30, 3
      %p143 = por %p141, %p142
      %p145 = scmp.ne.s32.totalorder %s128, %s144
      %p146 = scmp.eq.s32.totalorder %s30, 0
      %p147 = por %p145, %p146
      %s148 = ssub.s32 %s32, %s39
      %p149 = scmp.eq.s32.totalorder %s148, 0
      %s151 = sadd.s32 %s150, 1
      %s152 = scalar_select %p149, %s150, %s151
      %p155 = pneg %p149
      %p156 = scmp.eq.s32.totalorder %s24, 3
      %p157 = por %p155, %p156
      %p158 = scmp.ne.s32.totalorder %s150, %s153
      %p159 = scmp.eq.s32.totalorder %s24, 0
      %p160 = por %p158, %p159
      %p161 = scmp.ne.s32.totalorder %s150, %s153
      %p162 = scmp.eq.s32.totalorder %s29, 3
      %p163 = por %p161, %p162
      %p164 = scmp.ne.s32.totalorder %s153, %s154
      %p165 = scmp.eq.s32.totalorder %s29, 0
      %p166 = por %p164, %p165
      %p167 = scmp.ne.s32.totalorder %s153, %s154
      %p168 = scmp.eq.s32.totalorder %s30, 3
      %p169 = por %p167, %p168
      %p171 = scmp.ne.s32.totalorder %s154, %s170
      %p172 = scmp.eq.s32.totalorder %s30, 0
      %p173 = por %p171, %p172
      %s174 = ssub.s32 %s32, %s39
      %p175 = scmp.eq.s32.totalorder %s174, 0
      %s177 = sadd.s32 %s176, 1
      %s178 = scalar_select %p175, %s176, %s177
      %p181 = pneg %p175
      %p182 = scmp.eq.s32.totalorder %s24, 3
      %p183 = por %p181, %p182
      %p184 = scmp.ne.s32.totalorder %s176, %s179
      %p185 = scmp.eq.s32.totalorder %s24, 0
      %p186 = por %p184, %p185
      %p187 = scmp.ne.s32.totalorder %s176, %s179
      %p188 = scmp.eq.s32.totalorder %s29, 3
      %p189 = por %p187, %p188
      %p190 = scmp.ne.s32.totalorder %s179, %s180
      %p191 = scmp.eq.s32.totalorder %s29, 0
      %p192 = por %p190, %p191
      %p193 = scmp.ne.s32.totalorder %s179, %s180
      %p194 = scmp.eq.s32.totalorder %s30, 3
      %p195 = por %p193, %p194
      %p197 = scmp.ne.s32.totalorder %s180, %s196
      %p198 = scmp.eq.s32.totalorder %s30, 0
      %p199 = por %p197, %p198
      %s200 = ssub.s32 %s32, %s39
      %p201 = scmp.eq.s32.totalorder %s200, 0
      %s203 = sadd.s32 %s202, 1
      %s204 = scalar_select %p201, %s202, %s203
      %p207 = pneg %p201
      %p208 = scmp.eq.s32.totalorder %s24, 3
      %p209 = por %p207, %p208
      %p210 = scmp.ne.s32.totalorder %s202, %s205
      %p211 = scmp.eq.s32.totalorder %s24, 0
      %p212 = por %p210, %p211
      %p213 = scmp.ne.s32.totalorder %s202, %s205
      %p214 = scmp.eq.s32.totalorder %s29, 3
      %p215 = por %p213, %p214
      %p216 = scmp.ne.s32.totalorder %s205, %s206
      %p217 = scmp.eq.s32.totalorder %s29, 0
      %p218 = por %p216, %p217
      %p219 = scmp.ne.s32.totalorder %s205, %s206
      %p220 = scmp.eq.s32.totalorder %s30, 3
      %p221 = por %p219, %p220
      %p223 = scmp.ne.s32.totalorder %s206, %s222
      %p224 = scmp.eq.s32.totalorder %s30, 0
      %p225 = por %p223, %p224
      %s226 = ssub.s32 %s32, %s39
      %p227 = scmp.eq.s32.totalorder %s226, 0
      %s229 = sadd.s32 %s228, 1
      %s230 = scalar_select %p227, %s228, %s229
      %p233 = pneg %p227
      %p234 = scmp.eq.s32.totalorder %s24, 3
      %p235 = por %p233, %p234
      %p236 = scmp.ne.s32.totalorder %s228, %s231
      %p237 = scmp.eq.s32.totalorder %s24, 0
      %p238 = por %p236, %p237
      %p239 = scmp.ne.s32.totalorder %s228, %s231
      %p240 = scmp.eq.s32.totalorder %s29, 3
      %p241 = por %p239, %p240
      %p242 = scmp.ne.s32.totalorder %s231, %s232
      %p243 = scmp.eq.s32.totalorder %s29, 0
      %p244 = por %p242, %p243
      %p245 = scmp.ne.s32.totalorder %s231, %s232
      %p246 = scmp.eq.s32.totalorder %s30, 3
      %p247 = por %p245, %p246
      %p249 = scmp.ne.s32.totalorder %s232, %s248
      %p250 = scmp.eq.s32.totalorder %s30, 0
      %p251 = por %p249, %p250
      %s252 = ssub.s32 %s32, %s39
      %p253 = scmp.eq.s32.totalorder %s252, 0
      %s255 = sadd.s32 %s254, 1
      %s256 = scalar_select %p253, %s254, %s255
      %p259 = pneg %p253
      %p260 = scmp.eq.s32.totalorder %s24, 3
      %p261 = por %p259, %p260
      %p262 = scmp.ne.s32.totalorder %s254, %s257
      %p263 = scmp.eq.s32.totalorder %s24, 0
      %p264 = por %p262, %p263
      %p265 = scmp.ne.s32.totalorder %s254, %s257
      %p266 = scmp.eq.s32.totalorder %s29, 3
      %p267 = por %p265, %p266
      %p268 = scmp.ne.s32.totalorder %s257, %s258
      %p269 = scmp.eq.s32.totalorder %s29, 0
      %p270 = por %p268, %p269
      %p271 = scmp.ne.s32.totalorder %s257, %s258
      %p272 = scmp.eq.s32.totalorder %s30, 3
      %p273 = por %p271, %p272
      %p275 = scmp.ne.s32.totalorder %s258, %s274
      %p276 = scmp.eq.s32.totalorder %s30, 0
      %p277 = por %p275, %p276
      %s278 = ssub.s32 %s32, %s39
      %p279 = scmp.eq.s32.totalorder %s278, 0
      %s281 = sadd.s32 %s280, 1
      %s282 = scalar_select %p279, %s280, %s281
      %p285 = pneg %p279
      %p286 = scmp.eq.s32.totalorder %s24, 3
      %p287 = por %p285, %p286
      %p288 = scmp.ne.s32.totalorder %s280, %s283
      %p289 = scmp.eq.s32.totalorder %s24, 0
      %p290 = por %p288, %p289
      %p291 = scmp.ne.s32.totalorder %s280, %s283
      %p292 = scmp.eq.s32.totalorder %s29, 3
      %p293 = por %p291, %p292
      %p294 = scmp.ne.s32.totalorder %s283, %s284
      %p295 = scmp.eq.s32.totalorder %s29, 0
      %p296 = por %p294, %p295
      %p297 = scmp.ne.s32.totalorder %s283, %s284
      %p298 = scmp.eq.s32.totalorder %s30, 3
      %p299 = por %p297, %p298
      %p301 = scmp.ne.s32.totalorder %s284, %s300
      %p302 = scmp.eq.s32.totalorder %s30, 0
      %p303 = por %p301, %p302
      %s304 = ssub.s32 %s32, %s39
      %p305 = scmp.eq.s32.totalorder %s304, 0
      %s307 = sadd.s32 %s306, 1
      %s308 = scalar_select %p305, %s306, %s307
      %p311 = pneg %p305
      %p312 = scmp.eq.s32.totalorder %s24, 3
      %p313 = por %p311, %p312
      %p314 = scmp.ne.s32.totalorder %s306, %s309
      %p315 = scmp.eq.s32.totalorder %s24, 0
      %p316 = por %p314, %p315
      %p317 = scmp.ne.s32.totalorder %s306, %s309
      %p318 = scmp.eq.s32.totalorder %s29, 3
      %p319 = por %p317, %p318
      %p320 = scmp.ne.s32.totalorder %s309, %s310
      %p321 = scmp.eq.s32.totalorder %s29, 0
      %p322 = por %p320, %p321
      %p323 = scmp.ne.s32.totalorder %s309, %s310
      %p324 = scmp.eq.s32.totalorder %s30, 3
      %p325 = por %p323, %p324
      %p327 = scmp.ne.s32.totalorder %s310, %s326
      %p328 = scmp.eq.s32.totalorder %s30, 0
      %p329 = por %p327, %p328
      %s330 = ssub.s32 %s32, %s39
      %p331 = scmp.eq.s32.totalorder %s330, 0
      %s333 = sadd.s32 %s332, 1
      %s334 = scalar_select %p331, %s332, %s333
      %p337 = pneg %p331
      %p338 = scmp.eq.s32.totalorder %s24, 3
      %p339 = por %p337, %p338
      %p340 = scmp.ne.s32.totalorder %s332, %s335
      %p341 = scmp.eq.s32.totalorder %s24, 0
      %p342 = por %p340, %p341
      %p343 = scmp.ne.s32.totalorder %s332, %s335
      %p344 = scmp.eq.s32.totalorder %s29, 3
      %p345 = por %p343, %p344
      %p346 = scmp.ne.s32.totalorder %s335, %s336
      %p347 = scmp.eq.s32.totalorder %s29, 0
      %p348 = por %p346, %p347
      %p349 = scmp.ne.s32.totalorder %s335, %s336
      %p350 = scmp.eq.s32.totalorder %s30, 3
      %p351 = por %p349, %p350
      %p353 = scmp.ne.s32.totalorder %s336, %s352
      %p354 = scmp.eq.s32.totalorder %s30, 0
      %p355 = por %p353, %p354
      %s356 = ssub.s32 %s32, %s39
      %p357 = scmp.eq.s32.totalorder %s356, 0
      %s359 = sadd.s32 %s358, 1
      %s360 = scalar_select %p357, %s358, %s359
      %p363 = pneg %p357
      %p364 = scmp.eq.s32.totalorder %s24, 3
      %p365 = por %p363, %p364
      %p366 = scmp.ne.s32.totalorder %s358, %s361
      %p367 = scmp.eq.s32.totalorder %s24, 0
      %p368 = por %p366, %p367
      %p369 = scmp.ne.s32.totalorder %s358, %s361
      %p370 = scmp.eq.s32.totalorder %s29, 3
      %p371 = por %p369, %p370
      %p372 = scmp.ne.s32.totalorder %s361, %s362
      %p373 = scmp.eq.s32.totalorder %s29, 0
      %p374 = por %p372, %p373
      %p375 = scmp.ne.s32.totalorder %s361, %s362
      %p376 = scmp.eq.s32.totalorder %s30, 3
      %p377 = por %p375, %p376
      %p379 = scmp.ne.s32.totalorder %s362, %s378
      %p380 = scmp.eq.s32.totalorder %s30, 0
      %p381 = por %p379, %p380
      %s383 = sadd.s32 %s382, 1
      %p386 = scmp.eq.s32.totalorder %s24, 3
      %p387 = scmp.ne.s32.totalorder %s382, %s384
      %p388 = scmp.eq.s32.totalorder %s24, 0
      %p389 = por %p387, %p388
      %p390 = scmp.ne.s32.totalorder %s382, %s384
      %p391 = scmp.eq.s32.totalorder %s29, 3
      %p392 = por %p390, %p391
      %p393 = scmp.ne.s32.totalorder %s384, %s385
      %p394 = scmp.eq.s32.totalorder %s29, 0
      %p395 = por %p393, %p394
      %p396 = scmp.ne.s32.totalorder %s384, %s385
      %p397 = scmp.eq.s32.totalorder %s30, 3
      %p398 = por %p396, %p397
      %p400 = scmp.ne.s32.totalorder %s385, %s399
      %p401 = scmp.eq.s32.totalorder %s30, 0
      %p402 = por %p400, %p401
      %s404 = sadd.s32 %s403, 1
      %p407 = scmp.eq.s32.totalorder %s24, 3
      %p408 = scmp.ne.s32.totalorder %s403, %s405
      %p409 = scmp.eq.s32.totalorder %s24, 0
      %p410 = por %p408, %p409
      %p411 = scmp.ne.s32.totalorder %s403, %s405
      %p412 = scmp.eq.s32.totalorder %s29, 3
      %p413 = por %p411, %p412
      %p414 = scmp.ne.s32.totalorder %s405, %s406
      %p415 = scmp.eq.s32.totalorder %s29, 0
      %p416 = por %p414, %p415
      %p417 = scmp.ne.s32.totalorder %s405, %s406
      %p418 = scmp.eq.s32.totalorder %s30, 3
      %p419 = por %p417, %p418
      %p421 = scmp.ne.s32.totalorder %s406, %s420
      %p422 = scmp.eq.s32.totalorder %s30, 0
      %p423 = por %p421, %p422
      %s424 = ssub.s32 %s31, %s43
      %p425 = scmp.eq.s32.totalorder %s424, 0
      %s427 = sadd.s32 %s426, 1
      %s428 = scalar_select %p425, %s426, %s427
      %p431 = pneg %p425
      %p432 = scmp.eq.s32.totalorder %s24, 3
      %p433 = por %p431, %p432
      %p434 = scmp.ne.s32.totalorder %s426, %s429
      %p435 = scmp.eq.s32.totalorder %s24, 0
      %p436 = por %p434, %p435
      %p437 = scmp.ne.s32.totalorder %s426, %s429
      %p438 = scmp.eq.s32.totalorder %s29, 3
      %p439 = por %p437, %p438
      %p440 = scmp.ne.s32.totalorder %s429, %s430
      %p441 = scmp.eq.s32.totalorder %s29, 0
      %p442 = por %p440, %p441
      %p443 = scmp.ne.s32.totalorder %s429, %s430
      %p444 = scmp.eq.s32.totalorder %s30, 3
      %p445 = por %p443, %p444
      %p447 = scmp.ne.s32.totalorder %s430, %s446
      %p448 = scmp.eq.s32.totalorder %s30, 0
      %p449 = por %p447, %p448
      %p450 = scmp.le.s32.totalorder 1, %s24
      %p451 = scmp.lt.s32.totalorder %s24, 5
      %p452 = pnand %p450, %p451
      %p453 = pneg %p452
      // Predicated region
      $region9: #{tpu_custom_call.1} parent=5 // pred_check
        _
      $region10: #{tpu_custom_call.1} parent=5 // pred_check_branch
        %455 = sbr.rel (%p452) target = $region12
      $region11: #{tpu_custom_call.1} parent=5 // pred_region
        %s456 = ssub.s32 %s24, 1
        // Predicated region
        $region13: #{tpu_custom_call.1} parent=11 // pred_check
          %p457 = pneg %p395
        $region14: #{tpu_custom_call.1} parent=11 // pred_check_branch
          %459 = sbr.rel (%p457) target = $region16
        $region15: #{tpu_custom_call.1} parent=11 // pred_region
          _
        $region16: #{tpu_custom_call.1} parent=11 // pred_fallthru
          _
        // Predicated region
        $region17: #{tpu_custom_call.1} parent=11 // pred_check
          %p460 = pneg %p416
        $region18: #{tpu_custom_call.1} parent=11 // pred_check_branch
          %462 = sbr.rel (%p460) target = $region20
        $region19: #{tpu_custom_call.1} parent=11 // pred_region
          _
        $region20: #{tpu_custom_call.1} parent=11 // pred_fallthru
          _
      $region12: #{tpu_custom_call.1} parent=5 // pred_fallthru
        _
      %p463 = scmp.lt.s32.totalorder %s24, 4
      // Predicated region
      $region21: #{tpu_custom_call.1} parent=5 // pred_check
        %p464 = pneg %p463
      $region22: #{tpu_custom_call.1} parent=5 // pred_check_branch
        %466 = sbr.rel (%p464) target = $region24
      $region23: #{tpu_custom_call.1} parent=5 // pred_region
        // Predicated region
        $region25: #{tpu_custom_call.1} parent=23 // pred_check
          %p467 = pneg %p56
        $region26: #{tpu_custom_call.1} parent=23 // pred_check_branch
          %469 = sbr.rel (%p467) target = $region28
        $region27: #{tpu_custom_call.1} parent=23 // pred_region
          %p470 = scmp.lt.s32.totalorder %s31, 1
          %s471 = scalar_select %p470, %s31, 1
          %s472 = smul.addr %s471, 8
          %s473 = scalar_lea.vmem %s0, %s472
        $region28: #{tpu_custom_call.1} parent=23 // pred_fallthru
          _
        // Predicated region
        $region29: #{tpu_custom_call.1} parent=23 // pred_check
          %p474 = pneg %p82
        $region30: #{tpu_custom_call.1} parent=23 // pred_check_branch
          %476 = sbr.rel (%p474) target = $region32
        $region31: #{tpu_custom_call.1} parent=23 // pred_region
          %p477 = scmp.lt.s32.totalorder %s32, 1
          %s478 = scalar_select %p477, %s32, 1
          %s479 = smul.addr %s478, 4
          %s480 = smul.addr %s479, 4
          %s481 = scalar_lea.vmem %s1, %s480
        $region32: #{tpu_custom_call.1} parent=23 // pred_fallthru
          _
        // Predicated region
        $region33: #{tpu_custom_call.1} parent=23 // pred_check
          %p482 = pneg %p108
        $region34: #{tpu_custom_call.1} parent=23 // pred_check_branch
          %484 = sbr.rel (%p482) target = $region36
        $region35: #{tpu_custom_call.1} parent=23 // pred_region
          %p485 = scmp.lt.s32.totalorder %s32, 1
          %s486 = scalar_select %p485, %s32, 1
          %s487 = scalar_lea.vmem %s2, %s486
        $region36: #{tpu_custom_call.1} parent=23 // pred_fallthru
          _
        // Predicated region
        $region37: #{tpu_custom_call.1} parent=23 // pred_check
          %p488 = pneg %p134
        $region38: #{tpu_custom_call.1} parent=23 // pred_check_branch
          %490 = sbr.rel (%p488) target = $region40
        $region39: #{tpu_custom_call.1} parent=23 // pred_region
          %p491 = scmp.lt.s32.totalorder %s32, 1
          %s492 = scalar_select %p491, %s32, 1
          %s493 = smul.addr %s492, 4
          %s494 = smul.addr %s493, 4
          %s495 = scalar_lea.vmem %s3, %s494
        $region40: #{tpu_custom_call.1} parent=23 // pred_fallthru
          _
        // Predicated region
        $region41: #{tpu_custom_call.1} parent=23 // pred_check
          %p496 = pneg %p160
        $region42: #{tpu_custom_call.1} parent=23 // pred_check_branch
          %498 = sbr.rel (%p496) target = $region44
        $region43: #{tpu_custom_call.1} parent=23 // pred_region
          %p499 = scmp.lt.s32.totalorder %s32, 1
          %s500 = scalar_select %p499, %s32, 1
          %s501 = scalar_lea.vmem %s4, %s500
        $region44: #{tpu_custom_call.1} parent=23 // pred_fallthru
          _
        // Predicated region
        $region45: #{tpu_custom_call.1} parent=23 // pred_check
          %p502 = pneg %p186
        $region46: #{tpu_custom_call.1} parent=23 // pred_check_branch
          %504 = sbr.rel (%p502) target = $region48
        $region47: #{tpu_custom_call.1} parent=23 // pred_region
          %p505 = scmp.lt.s32.totalorder %s32, 1
          %s506 = scalar_select %p505, %s32, 1
          %s507 = scalar_lea.vmem %s5, %s506
        $region48: #{tpu_custom_call.1} parent=23 // pred_fallthru
          _
        // Predicated region
        $region49: #{tpu_custom_call.1} parent=23 // pred_check
          %p508 = pneg %p212
        $region50: #{tpu_custom_call.1} parent=23 // pred_check_branch
          %510 = sbr.rel (%p508) target = $region52
        $region51: #{tpu_custom_call.1} parent=23 // pred_region
          %p511 = scmp.lt.s32.totalorder %s32, 1
          %s512 = scalar_select %p511, %s32, 1
          %s513 = scalar_lea.vmem %s6, %s512
        $region52: #{tpu_custom_call.1} parent=23 // pred_fallthru
          _
        // Predicated region
        $region53: #{tpu_custom_call.1} parent=23 // pred_check
          %p514 = pneg %p238
        $region54: #{tpu_custom_call.1} parent=23 // pred_check_branch
          %516 = sbr.rel (%p514) target = $region56
        $region55: #{tpu_custom_call.1} parent=23 // pred_region
          %p517 = scmp.lt.s32.totalorder %s32, 1
          %s518 = scalar_select %p517, %s32, 1
          %s519 = smul.addr %s518, 4
          %s520 = smul.addr %s519, 4
          %s521 = scalar_lea.vmem %s7, %s520
        $region56: #{tpu_custom_call.1} parent=23 // pred_fallthru
          _
        // Predicated region
        $region57: #{tpu_custom_call.1} parent=23 // pred_check
          %p522 = pneg %p264
        $region58: #{tpu_custom_call.1} parent=23 // pred_check_branch
          %524 = sbr.rel (%p522) target = $region60
        $region59: #{tpu_custom_call.1} parent=23 // pred_region
          %p525 = scmp.lt.s32.totalorder %s32, 1
          %s526 = scalar_select %p525, %s32, 1
          %s527 = scalar_lea.vmem %s8, %s526
        $region60: #{tpu_custom_call.1} parent=23 // pred_fallthru
          _
        // Predicated region
        $region61: #{tpu_custom_call.1} parent=23 // pred_check
          %p528 = pneg %p290
        $region62: #{tpu_custom_call.1} parent=23 // pred_check_branch
          %530 = sbr.rel (%p528) target = $region64
        $region63: #{tpu_custom_call.1} parent=23 // pred_region
          %p531 = scmp.lt.s32.totalorder %s32, 1
          %s532 = scalar_select %p531, %s32, 1
          %s533 = smul.addr %s532, 16
          %s534 = smul.addr %s533, 4
          %s535 = scalar_lea.vmem %s9, %s534
        $region64: #{tpu_custom_call.1} parent=23 // pred_fallthru
          _
        // Predicated region
        $region65: #{tpu_custom_call.1} parent=23 // pred_check
          %p536 = pneg %p316
        $region66: #{tpu_custom_call.1} parent=23 // pred_check_branch
          %538 = sbr.rel (%p536) target = $region68
        $region67: #{tpu_custom_call.1} parent=23 // pred_region
          %p539 = scmp.lt.s32.totalorder %s32, 1
          %s540 = scalar_select %p539, %s32, 1
          %s541 = scalar_lea.vmem %s10, %s540
        $region68: #{tpu_custom_call.1} parent=23 // pred_fallthru
          _
        // Predicated region
        $region69: #{tpu_custom_call.1} parent=23 // pred_check
          %p542 = pneg %p342
        $region70: #{tpu_custom_call.1} parent=23 // pred_check_branch
          %544 = sbr.rel (%p542) target = $region72
        $region71: #{tpu_custom_call.1} parent=23 // pred_region
          %p545 = scmp.lt.s32.totalorder %s32, 1
          %s546 = scalar_select %p545, %s32, 1
          %s547 = scalar_lea.vmem %s11, %s546
        $region72: #{tpu_custom_call.1} parent=23 // pred_fallthru
          _
        // Predicated region
        $region73: #{tpu_custom_call.1} parent=23 // pred_check
          %p548 = pneg %p368
        $region74: #{tpu_custom_call.1} parent=23 // pred_check_branch
          %550 = sbr.rel (%p548) target = $region76
        $region75: #{tpu_custom_call.1} parent=23 // pred_region
          %p551 = scmp.lt.s32.totalorder %s32, 1
          %s552 = scalar_select %p551, %s32, 1
          %s553 = scalar_lea.vmem %s12, %s552
        $region76: #{tpu_custom_call.1} parent=23 // pred_fallthru
          _
      $region24: #{tpu_custom_call.1} parent=5 // pred_fallthru
        _
      %p554 = scmp.le.s32.totalorder 1, %s24
      %p555 = scmp.lt.s32.totalorder %s24, 5
      %p556 = pnand %p554, %p555
      %p557 = pneg %p556
      // Predicated region
      $region77: #{tpu_custom_call.1} parent=5 // pred_check
        _
      $region78: #{tpu_custom_call.1} parent=5 // pred_check_branch
        %559 = sbr.rel (%p556) target = $region80
      $region79: #{tpu_custom_call.1} parent=5 // pred_region
        %s560 = ssub.s32 %s24, 1
        %p561 = scmp.lt.s32.totalorder %s33, 1
        %s562 = scalar_select %p561, %s33, 1
        %s563 = smul.addr %s562, 8
        %s564 = scalar_lea.vmem %s0, %s563
        %p565 = pneg %p62
        %p566 = pneg %p59
        %p567 = scmp.lt.s32.totalorder %s34, 1
        %s568 = scalar_select %p567, %s34, 1
        %s569 = smul.addr %s568, 4
        %s570 = smul.addr %s569, 4
        %s571 = scalar_lea.vmem %s1, %s570
        %p572 = pneg %p88
        %p573 = pneg %p85
        %p574 = scmp.lt.s32.totalorder %s34, 1
        %s575 = scalar_select %p574, %s34, 1
        %s576 = scalar_lea.vmem %s2, %s575
        %p577 = pneg %p114
        %p578 = pneg %p111
        %p579 = scmp.lt.s32.totalorder %s34, 1
        %s580 = scalar_select %p579, %s34, 1
        %s581 = smul.addr %s580, 4
        %s582 = smul.addr %s581, 4
        %s583 = scalar_lea.vmem %s3, %s582
        %p584 = pneg %p140
        %p585 = pneg %p137
        %p586 = scmp.lt.s32.totalorder %s34, 1
        %s587 = scalar_select %p586, %s34, 1
        %s588 = scalar_lea.vmem %s4, %s587
        %p589 = pneg %p166
        %p590 = pneg %p163
        %p591 = scmp.lt.s32.totalorder %s34, 1
        %s592 = scalar_select %p591, %s34, 1
        %s593 = scalar_lea.vmem %s5, %s592
        %p594 = pneg %p192
        %p595 = pneg %p189
        %p596 = scmp.lt.s32.totalorder %s34, 1
        %s597 = scalar_select %p596, %s34, 1
        %s598 = scalar_lea.vmem %s6, %s597
        %p599 = pneg %p218
        %p600 = pneg %p215
        %p601 = scmp.lt.s32.totalorder %s34, 1
        %s602 = scalar_select %p601, %s34, 1
        %s603 = smul.addr %s602, 4
        %s604 = smul.addr %s603, 4
        %s605 = scalar_lea.vmem %s7, %s604
        %p606 = pneg %p244
        %p607 = pneg %p241
        %p608 = scmp.lt.s32.totalorder %s34, 1
        %s609 = scalar_select %p608, %s34, 1
        %s610 = scalar_lea.vmem %s8, %s609
        %p611 = pneg %p270
        %p612 = pneg %p267
        %p613 = scmp.lt.s32.totalorder %s34, 1
        %s614 = scalar_select %p613, %s34, 1
        %s615 = smul.addr %s614, 16
        %s616 = smul.addr %s615, 4
        %s617 = scalar_lea.vmem %s9, %s616
        %p618 = pneg %p296
        %p619 = pneg %p293
        %p620 = scmp.lt.s32.totalorder %s34, 1
        %s621 = scalar_select %p620, %s34, 1
        %s622 = scalar_lea.vmem %s10, %s621
        %p623 = pneg %p322
        %p624 = pneg %p319
        %p625 = scmp.lt.s32.totalorder %s34, 1
        %s626 = scalar_select %p625, %s34, 1
        %s627 = scalar_lea.vmem %s11, %s626
        %p628 = pneg %p348
        %p629 = pneg %p345
        %p630 = scmp.lt.s32.totalorder %s34, 1
        %s631 = scalar_select %p630, %s34, 1
        %s632 = scalar_lea.vmem %s12, %s631
        %p633 = pneg %p374
        %p634 = pneg %p371
        %p635 = pneg %p395
        %p636 = pneg %p392
        %p637 = pneg %p416
        %p638 = pneg %p413
        %p639 = pneg %p442
        %p640 = pneg %p439
        %s641 = sand.u32 %s429, 1
        %s642 = scalar_lea.sflag [#allocation4], %s641
        %s643 = sand.u32 %s429, 1
        %s644 = smul.addr %s643, 8
        %s645 = scalar_lea.vmem [#allocation3], %s644
        %p646 = scmp.lt.s32.totalorder %s33, 1
        %s647 = scalar_select %p646, %s33, 1
        %s648 = smul.addr %s647, 8
        %s649 = scalar_lea.vmem %s0, %s648
        %p650 = scmp.lt.s32.totalorder %s34, 1
        %s651 = scalar_select %p650, %s34, 1
        %s652 = smul.addr %s651, 4
        %s653 = smul.addr %s652, 4
        %s654 = scalar_lea.vmem %s1, %s653
        %p655 = scmp.lt.s32.totalorder %s34, 1
        %s656 = scalar_select %p655, %s34, 1
        %s657 = scalar_lea.vmem %s2, %s656
        %p658 = scmp.lt.s32.totalorder %s34, 1
        %s659 = scalar_select %p658, %s34, 1
        %s660 = smul.addr %s659, 4
        %s661 = smul.addr %s660, 4
        %s662 = scalar_lea.vmem %s3, %s661
        %p663 = scmp.lt.s32.totalorder %s34, 1
        %s664 = scalar_select %p663, %s34, 1
        %s665 = scalar_lea.vmem %s4, %s664
        %p666 = scmp.lt.s32.totalorder %s34, 1
        %s667 = scalar_select %p666, %s34, 1
        %s668 = scalar_lea.vmem %s5, %s667
        %p669 = scmp.lt.s32.totalorder %s34, 1
        %s670 = scalar_select %p669, %s34, 1
        %s671 = scalar_lea.vmem %s6, %s670
        %p672 = scmp.lt.s32.totalorder %s34, 1
        %s673 = scalar_select %p672, %s34, 1
        %s674 = smul.addr %s673, 4
        %s675 = smul.addr %s674, 4
        %s676 = scalar_lea.vmem %s7, %s675
        %p677 = scmp.lt.s32.totalorder %s34, 1
        %s678 = scalar_select %p677, %s34, 1
        %s679 = scalar_lea.vmem %s8, %s678
        %p680 = scmp.lt.s32.totalorder %s34, 1
        %s681 = scalar_select %p680, %s34, 1
        %s682 = smul.addr %s681, 16
        %s683 = smul.addr %s682, 4
        %s684 = scalar_lea.vmem %s9, %s683
        %p685 = scmp.lt.s32.totalorder %s34, 1
        %s686 = scalar_select %p685, %s34, 1
        %s687 = scalar_lea.vmem %s10, %s686
        %p688 = scmp.lt.s32.totalorder %s34, 1
        %s689 = scalar_select %p688, %s34, 1
        %s690 = scalar_lea.vmem %s11, %s689
        %p691 = scmp.lt.s32.totalorder %s34, 1
        %s692 = scalar_select %p691, %s34, 1
        %s693 = scalar_lea.vmem %s12, %s692
        %p695 = scmp.eq.s32.totalorder %s34, 0
        // Predicated region
        $region81: #{tpu_custom_call.1} parent=79 // pred_check
          %p696 = pneg %p695
        $region82: #{tpu_custom_call.1} parent=79 // pred_check_branch
          %698 = sbr.rel (%p696) target = $region84
        $region83: #{tpu_custom_call.1} parent=79 // pred_region
          %v699 = vld [vmem:[%s649] sm:$0xff]
          %vm700 = vcmask 261120
          %701 = vst.msk [vmem:[#allocation2] sm:$0xff] %vm700, %v699
        $region84: #{tpu_custom_call.1} parent=79 // pred_fallthru
          _
        %v702 = vld [vmem:[#allocation2] sm:$0xff]
        %v703 = vpack.c.bf16 %v702, %v702
        %v704 = vld [vmem:[%s654] sm:$0xf]
        %v705 = vld [vmem:[%s654 + $0x4] sm:$0xf]
        %v706 = vld [vmem:[%s654 + $0x8] sm:$0xf]
        %v707 = vld [vmem:[%s654 + $0xc] sm:$0xf]
        %v708 = vld [vmem:[%s657] sm:$0x1]
        %v710 = vperm.slane %v708, 0
        %v716 = vunpack.c.l.b16 %v704
        %v717 = vunpack.c.l.b16 %v705
        %v718 = vunpack.c.l.b16 %v706
        %v719 = vunpack.c.l.b16 %v707
        %v720 = vpack.c.b16 %v717, %v716
        %v721 = vpack.c.b16 %v719, %v718
        %vm724 = vcmask 261120
        %v726 = vsel %vm724, %v703, 0
        %728 = vmatpush.bf16.msra.mxu0 0
        %729 = vmatpush.bf16.msra.mxu0 0
        %730 = vmatpush.bf16.msra.mxu0 0
        %731 = vmatpush.bf16.msra.mxu0 0
        %732 = vmatpush.bf16.msra.mxu0 0
        %733 = vmatpush.bf16.msra.mxu0 0
        %734 = vmatpush.bf16.msra.mxu0 %v721
        %735 = vmatpush.bf16.msra.mxu0 %v720
        %736 = vmatmul.bf16.gmra.mxu0 %v726
        %v737 = vpop.f32.mrf.mxu0
        %v738 = vadd.f32 %v710, %v737
        %v739 = vpop.f32.mrf.mxu0
        %740 = vdwg.mxu0
        %742 = vrot.lane.b32.xlu0 %v738, 120
        %v743 = vpop.permute.xlu0 %742
        %745 = vrot.lane.b32.xlu0 %v738, 112
        %v746 = vpop.permute.xlu0 %745
        %748 = vrot.lane.b32.xlu0 %v738, 104
        %v749 = vpop.permute.xlu0 %748
        %v751 = vpack.c.bf16 %v738, %v738
        %v752 = vpack.c.bf16 %v743, %v743
        %v753 = vpack.c.bf16 %v746, %v746
        %v754 = vpack.c.bf16 %v749, %v749
        %v756 = vunpack.c.l.b16 %v751
        %v757 = vpack.c.b16 %v756, %v756
        %758 = vrot.lane.b32.xlu0 %v757, 96
        %v759 = vpop.permute.xlu0 %758
        %vm760 = vcmask 64512
        %v762 = vsel %vm760, %v751, 0
        %v765 = vsel %vm760, %v759, 0
        %767 = vmatpush.bf16.xpose.msra.mxu0 0
        %768 = vmatpush.bf16.xpose.msra.mxu0 0
        %769 = vmatpush.bf16.xpose.msra.mxu0 0
        %770 = vmatpush.bf16.xpose.msra.mxu0 0
        %771 = vmatpush.bf16.xpose.msra.mxu0 0
        %772 = vmatpush.bf16.xpose.msra.mxu0 0
        %773 = vmatpush.bf16.xpose.msra.mxu0 0
        %774 = vmatpush.bf16.xpose.msra.mxu0 %v765
        %775 = vmatmul.bf16.gmra.mxu0 %v762
        %v776 = vpop.f32.mrf.mxu0
        %v777 = vadd.f32 0.0, %v776
        %v778 = vpop.f32.mrf.mxu0
        %779 = vdwg.mxu0
        %v781 = vunpack.c.l.b16 %v752
        %v782 = vpack.c.b16 %v781, %v781
        %783 = vrot.lane.b32.xlu0 %v782, 96
        %v784 = vpop.permute.xlu0 %783
        %v786 = vsel %vm760, %v752, 0
        %v789 = vsel %vm760, %v784, 0
        %791 = vmatpush.bf16.xpose.msra.mxu0 0
        %792 = vmatpush.bf16.xpose.msra.mxu0 0
        %793 = vmatpush.bf16.xpose.msra.mxu0 0
        %794 = vmatpush.bf16.xpose.msra.mxu0 0
        %795 = vmatpush.bf16.xpose.msra.mxu0 0
        %796 = vmatpush.bf16.xpose.msra.mxu0 0
        %797 = vmatpush.bf16.xpose.msra.mxu0 0
        %798 = vmatpush.bf16.xpose.msra.mxu0 %v789
        %799 = vmatmul.bf16.gmra.mxu0 %v786
        %v800 = vpop.f32.mrf.mxu0
        %v801 = vadd.f32 0.0, %v800
        %v802 = vpop.f32.mrf.mxu0
        %803 = vdwg.mxu0
        %v805 = vunpack.c.l.b16 %v753
        %v806 = vpack.c.b16 %v805, %v805
        %807 = vrot.lane.b32.xlu0 %v806, 96
        %v808 = vpop.permute.xlu0 %807
        %v810 = vsel %vm760, %v753, 0
        %v813 = vsel %vm760, %v808, 0
        %815 = vmatpush.bf16.xpose.msra.mxu0 0
        %816 = vmatpush.bf16.xpose.msra.mxu0 0
        %817 = vmatpush.bf16.xpose.msra.mxu0 0
        %818 = vmatpush.bf16.xpose.msra.mxu0 0
        %819 = vmatpush.bf16.xpose.msra.mxu0 0
        %820 = vmatpush.bf16.xpose.msra.mxu0 0
        %821 = vmatpush.bf16.xpose.msra.mxu0 0
        %822 = vmatpush.bf16.xpose.msra.mxu0 %v813
        %823 = vmatmul.bf16.gmra.mxu0 %v810
        %v824 = vpop.f32.mrf.mxu0
        %v825 = vadd.f32 0.0, %v824
        %v826 = vpop.f32.mrf.mxu0
        %827 = vdwg.mxu0
        %v829 = vunpack.c.l.b16 %v754
        %v830 = vpack.c.b16 %v829, %v829
        %831 = vrot.lane.b32.xlu0 %v830, 96
        %v832 = vpop.permute.xlu0 %831
        %v834 = vsel %vm760, %v754, 0
        %v837 = vsel %vm760, %v832, 0
        %839 = vmatpush.bf16.xpose.msra.mxu0 0
        %840 = vmatpush.bf16.xpose.msra.mxu0 0
        %841 = vmatpush.bf16.xpose.msra.mxu0 0
        %842 = vmatpush.bf16.xpose.msra.mxu0 0
        %843 = vmatpush.bf16.xpose.msra.mxu0 0
        %844 = vmatpush.bf16.xpose.msra.mxu0 0
        %845 = vmatpush.bf16.xpose.msra.mxu0 0
        %846 = vmatpush.bf16.xpose.msra.mxu0 %v837
        %847 = vmatmul.bf16.gmra.mxu0 %v834
        %v848 = vpop.f32.mrf.mxu0
        %v849 = vadd.f32 0.0, %v848
        %v850 = vpop.f32.mrf.mxu0
        %851 = vdwg.mxu0
        %v852 = vsel %vm760, %v777, -inf
        %853 = vmax.xlane.f32.xlu0 %v852
        %v854 = vpop.xlane.xlu0 %853
        %v855 = vsel %vm760, %v801, -inf
        %856 = vmax.xlane.f32.xlu0 %v855
        %v857 = vpop.xlane.xlu0 %856
        %v858 = vsel %vm760, %v825, -inf
        %859 = vmax.xlane.f32.xlu0 %v858
        %v860 = vpop.xlane.xlu0 %859
        %v861 = vsel %vm760, %v849, -inf
        %862 = vmax.xlane.f32.xlu0 %v861
        %v863 = vpop.xlane.xlu0 %862
        %v864 = vsub.f32 %v777, %v854
        %v865 = vsub.f32 %v801, %v857
        %v866 = vsub.f32 %v825, %v860
        %v867 = vsub.f32 %v849, %v863
        %v868 = vmul.f32 %v864, 1.442695
        %v869 = vpow.pop %v868
        %v870 = vmul.f32 %v865, 1.442695
        %v871 = vpow.pop %v870
        %v872 = vmul.f32 %v866, 1.442695
        %v873 = vpow.pop %v872
        %v874 = vmul.f32 %v867, 1.442695
        %v875 = vpow.pop %v874
        %v876 = vsel %vm760, %v869, 0.0
        %877 = vadd.xlane.f32.xlu0 %v876
        %v878 = vpop.xlane.xlu0 %877
        %v879 = vsel %vm760, %v871, 0.0
        %880 = vadd.xlane.f32.xlu0 %v879
        %v881 = vpop.xlane.xlu0 %880
        %v882 = vsel %vm760, %v873, 0.0
        %883 = vadd.xlane.f32.xlu0 %v882
        %v884 = vpop.xlane.xlu0 %883
        %v885 = vsel %vm760, %v875, 0.0
        %886 = vadd.xlane.f32.xlu0 %v885
        %v887 = vpop.xlane.xlu0 %886
        %v888 = vrcp.pop %v878
        %v889 = vrcp.pop %v881
        %v890 = vrcp.pop %v884
        %v891 = vrcp.pop %v887
        %v892 = vmul.f32 %v869, %v888
        %v893 = vmul.f32 %v871, %v889
        %v894 = vmul.f32 %v873, %v890
        %v895 = vmul.f32 %v875, %v891
        %v896 = vpack.c.bf16 %v892, %v892
        %v897 = vpack.c.bf16 %v893, %v893
        %v898 = vpack.c.bf16 %v894, %v894
        %v899 = vpack.c.bf16 %v895, %v895
        %900 = vrot.lane.b32.xlu0 %v757, 64
        %v901 = vpop.permute.xlu0 %900
        %v903 = vsel %vm760, %v896, 0
        %vm905 = vcmask 1043456
        %v907 = vsel %vm905, %v901, 0
        %909 = vmatpush.bf16.msra.mxu0 0
        %910 = vmatpush.bf16.msra.mxu0 0
        %911 = vmatpush.bf16.msra.mxu0 0
        %912 = vmatpush.bf16.msra.mxu0 0
        %913 = vmatpush.bf16.msra.mxu0 0
        %914 = vmatpush.bf16.msra.mxu0 0
        %915 = vmatpush.bf16.msra.mxu0 0
        %916 = vmatpush.bf16.msra.mxu0 %v907
        %917 = vmatmul.bf16.gmra.mxu0 %v903
        %v918 = vpop.f32.mrf.mxu0
        %v919 = vadd.f32 0.0, %v918
        %v920 = vpop.f32.mrf.mxu0
        %921 = vdwg.mxu0
        %922 = vrot.lane.b32.xlu0 %v782, 64
        %v923 = vpop.permute.xlu0 %922
        %v925 = vsel %vm760, %v897, 0
        %v928 = vsel %vm905, %v923, 0
        %930 = vmatpush.bf16.msra.mxu0 0
        %931 = vmatpush.bf16.msra.mxu0 0
        %932 = vmatpush.bf16.msra.mxu0 0
        %933 = vmatpush.bf16.msra.mxu0 0
        %934 = vmatpush.bf16.msra.mxu0 0
        %935 = vmatpush.bf16.msra.mxu0 0
        %936 = vmatpush.bf16.msra.mxu0 0
        %937 = vmatpush.bf16.msra.mxu0 %v928
        %938 = vmatmul.bf16.gmra.mxu0 %v925
        %v939 = vpop.f32.mrf.mxu0
        %v940 = vadd.f32 0.0, %v939
        %v941 = vpop.f32.mrf.mxu0
        %942 = vdwg.mxu0
        %943 = vrot.lane.b32.xlu0 %v806, 64
        %v944 = vpop.permute.xlu0 %943
        %v946 = vsel %vm760, %v898, 0
        %v949 = vsel %vm905, %v944, 0
        %951 = vmatpush.bf16.msra.mxu0 0
        %952 = vmatpush.bf16.msra.mxu0 0
        %953 = vmatpush.bf16.msra.mxu0 0
        %954 = vmatpush.bf16.msra.mxu0 0
        %955 = vmatpush.bf16.msra.mxu0 0
        %956 = vmatpush.bf16.msra.mxu0 0
        %957 = vmatpush.bf16.msra.mxu0 0
        %958 = vmatpush.bf16.msra.mxu0 %v949
        %959 = vmatmul.bf16.gmra.mxu0 %v946
        %v960 = vpop.f32.mrf.mxu0
        %v961 = vadd.f32 0.0, %v960
        %v962 = vpop.f32.mrf.mxu0
        %963 = vdwg.mxu0
        %964 = vrot.lane.b32.xlu0 %v830, 64
        %v965 = vpop.permute.xlu0 %964
        %v967 = vsel %vm760, %v899, 0
        %v970 = vsel %vm905, %v965, 0
        %972 = vmatpush.bf16.msra.mxu0 0
        %973 = vmatpush.bf16.msra.mxu0 0
        %974 = vmatpush.bf16.msra.mxu0 0
        %975 = vmatpush.bf16.msra.mxu0 0
        %976 = vmatpush.bf16.msra.mxu0 0
        %977 = vmatpush.bf16.msra.mxu0 0
        %978 = vmatpush.bf16.msra.mxu0 0
        %979 = vmatpush.bf16.msra.mxu0 %v970
        %980 = vmatmul.bf16.gmra.mxu0 %v967
        %v981 = vpop.f32.mrf.mxu0
        %v982 = vadd.f32 0.0, %v981
        %v983 = vpop.f32.mrf.mxu0
        %984 = vdwg.mxu0
        %986 = vrot.lane.b32.xlu0 %v940, 8
        %v987 = vpop.permute.xlu0 %986
        %990 = vrot.lane.b32.xlu0 %v961, 16
        %v991 = vpop.permute.xlu0 %990
        %994 = vrot.lane.b32.xlu0 %v982, 24
        %v995 = vpop.permute.xlu0 %994
        %v997 = vsel %vm760, %v919, %v987
        %vm998 = vcmask 130048
        %v999 = vsel %vm998, %v997, %v991
        %vm1000 = vcmask 195584
        %v1001 = vsel %vm1000, %v999, %v995
        %v1002 = vpack.c.bf16 %v1001, %v1001
        %v1003 = vld [vmem:[%s662] sm:$0xf]
        %v1004 = vld [vmem:[%s662 + $0x4] sm:$0xf]
        %v1005 = vld [vmem:[%s662 + $0x8] sm:$0xf]
        %v1006 = vld [vmem:[%s662 + $0xc] sm:$0xf]
        %v1007 = vld [vmem:[%s665] sm:$0x1]
        %v1009 = vperm.slane %v1007, 0
        %v1015 = vunpack.c.l.b16 %v1003
        %v1016 = vunpack.c.l.b16 %v1004
        %v1017 = vunpack.c.l.b16 %v1005
        %v1018 = vunpack.c.l.b16 %v1006
        %v1019 = vpack.c.b16 %v1016, %v1015
        %v1020 = vpack.c.b16 %v1018, %v1017
        %v1024 = vsel %vm724, %v1002, 0
        %1026 = vmatpush.bf16.msra.mxu0 0
        %1027 = vmatpush.bf16.msra.mxu0 0
        %1028 = vmatpush.bf16.msra.mxu0 0
        %1029 = vmatpush.bf16.msra.mxu0 0
        %1030 = vmatpush.bf16.msra.mxu0 0
        %1031 = vmatpush.bf16.msra.mxu0 0
        %1032 = vmatpush.bf16.msra.mxu0 %v1020
        %1033 = vmatpush.bf16.msra.mxu0 %v1019
        %1034 = vmatmul.bf16.gmra.mxu0 %v1024
        %v1035 = vpop.f32.mrf.mxu0
        %v1036 = vadd.f32 %v1009, %v1035
        %v1037 = vpop.f32.mrf.mxu0
        %1038 = vdwg.mxu0
        %v1039 = vadd.f32 %v702, %v1036
        %v1040 = vld [vmem:[%s668] sm:$0x1]
        %v1041 = vld [vmem:[%s671] sm:$0x1]
        %v1042 = vsel %vm724, %v1039, 0.0
        %1043 = vadd.xlane.f32.xlu0 %v1042
        %v1044 = vpop.xlane.xlu0 %1043
        %v1045 = vrcp.pop 32.0
        %v1046 = vmul.f32 32.0, %v1045
        %v1047 = vsub.f32 1.0, %v1046
        %v1048 = vmul.f32 %v1045, %v1047
        %v1049 = vadd.f32 %v1045, %v1048
        %vm1050 = vweird.f32 %v1045
        %v1051 = vsel %vm1050, %v1045, %v1049
        %v1052 = vmul.f32 %v1044, %v1051
        %v1053 = vsub.f32 %v1039, %v1052
        %v1054 = vmul.f32 %v1053, %v1053
        %v1055 = vsel %vm724, %v1054, 0.0
        %1056 = vadd.xlane.f32.xlu0 %v1055
        %v1057 = vpop.xlane.xlu0 %1056
        %v1058 = vmul.f32 %v1057, %v1051
        %v1059 = vadd.f32 %v1058, 1e-12
        %v1060 = vrsqrt.pop %v1059
        %v1061 = vmul.f32 %v1060, %v1059
        %v1062 = vmul.f32 %v1061, %v1060
        %v1063 = vmul.f32 0.5, %v1062
        %v1064 = vsub.f32 1.5, %v1063
        %v1065 = vmul.f32 %v1060, %v1064
        %vm1066 = vweird.f32 %v1059
        %vm1067 = vweird.f32 %v1060
        %vm1068 = vmor %vm1066, %vm1067
        %v1069 = vsel %vm1068, %v1060, %v1065
        %v1070 = vmul.f32 %v1053, %v1069
        %v1072 = vperm.slane %v1040, 0
        %v1074 = vmul.f32 %v1070, %v1072
        %v1076 = vperm.slane %v1041, 0
        %v1078 = vadd.f32 %v1074, %v1076
        %v1079 = vpack.c.bf16 %v1078, %v1078
        %v1080 = vld [vmem:[%s676] sm:$0xf]
        %v1081 = vld [vmem:[%s676 + $0x4] sm:$0xf]
        %v1082 = vld [vmem:[%s676 + $0x8] sm:$0xf]
        %v1083 = vld [vmem:[%s676 + $0xc] sm:$0xf]
        %v1084 = vld [vmem:[%s679] sm:$0x1]
        %v1086 = vperm.slane %v1084, 0
        %v1092 = vunpack.c.l.b16 %v1080
        %v1093 = vunpack.c.l.b16 %v1081
        %v1094 = vunpack.c.l.b16 %v1082
        %v1095 = vunpack.c.l.b16 %v1083
        %v1096 = vpack.c.b16 %v1093, %v1092
        %v1097 = vpack.c.b16 %v1095, %v1094
        %v1101 = vsel %vm724, %v1079, 0
        %1103 = vmatpush.bf16.msra.mxu0 0
        %1104 = vmatpush.bf16.msra.mxu0 0
        %1105 = vmatpush.bf16.msra.mxu0 0
        %1106 = vmatpush.bf16.msra.mxu0 0
        %1107 = vmatpush.bf16.msra.mxu0 0
        %1108 = vmatpush.bf16.msra.mxu0 0
        %1109 = vmatpush.bf16.msra.mxu0 %v1097
        %1110 = vmatpush.bf16.msra.mxu0 %v1096
        %1111 = vmatmul.bf16.gmra.mxu0 %v1101
        %v1112 = vpop.f32.mrf.mxu0
        %v1113 = vadd.f32 %v1086, %v1112
        %v1114 = vpop.f32.mrf.mxu0
        %1115 = vdwg.mxu0
        %v1116 = vmul.f32 %v1113, 0.5
        %v1117 = vmul.f32 %v1113, 0.044715
        %v1118 = vmul.f32 %v1117, %v1113
        %v1119 = vmul.f32 %v1118, %v1113
        %v1120 = vadd.f32 %v1113, %v1119
        %v1121 = vmul.f32 %v1120, 0.7978846
        %v1122 = vtanh.pop %v1121
        %v1123 = vadd.f32 %v1122, 1.0
        %v1124 = vmul.f32 %v1116, %v1123
        %v1125 = vpack.c.bf16 %v1124, %v1124
        %v1126 = vld [vmem:[%s684] sm:$0xf]
        %v1127 = vld [vmem:[%s684 + $0x4] sm:$0xf]
        %v1128 = vld [vmem:[%s684 + $0x8] sm:$0xf]
        %v1129 = vld [vmem:[%s684 + $0xc] sm:$0xf]
        %v1130 = vld [vmem:[%s684 + $0x10] sm:$0xf]
        %v1131 = vld [vmem:[%s684 + $0x14] sm:$0xf]
        %v1132 = vld [vmem:[%s684 + $0x18] sm:$0xf]
        %v1133 = vld [vmem:[%s684 + $0x1c] sm:$0xf]
        %v1134 = vld [vmem:[%s684 + $0x20] sm:$0xf]
        %v1135 = vld [vmem:[%s684 + $0x24] sm:$0xf]
        %v1136 = vld [vmem:[%s684 + $0x28] sm:$0xf]
        %v1137 = vld [vmem:[%s684 + $0x2c] sm:$0xf]
        %v1138 = vld [vmem:[%s684 + $0x30] sm:$0xf]
        %v1139 = vld [vmem:[%s684 + $0x34] sm:$0xf]
        %v1140 = vld [vmem:[%s684 + $0x38] sm:$0xf]
        %v1141 = vld [vmem:[%s684 + $0x3c] sm:$0xf]
        %v1142 = vld [vmem:[%s687] sm:$0x1]
        %v1144 = vperm.slane %v1142, 0
        %v1162 = vunpack.c.l.b16 %v1126
        %v1163 = vunpack.c.l.b16 %v1127
        %v1164 = vunpack.c.l.b16 %v1128
        %v1165 = vunpack.c.l.b16 %v1129
        %v1166 = vunpack.c.l.b16 %v1130
        %v1167 = vunpack.c.l.b16 %v1131
        %v1168 = vunpack.c.l.b16 %v1132
        %v1169 = vunpack.c.l.b16 %v1133
        %v1170 = vunpack.c.l.b16 %v1134
        %v1171 = vunpack.c.l.b16 %v1135
        %v1172 = vunpack.c.l.b16 %v1136
        %v1173 = vunpack.c.l.b16 %v1137
        %v1174 = vunpack.c.l.b16 %v1138
        %v1175 = vunpack.c.l.b16 %v1139
        %v1176 = vunpack.c.l.b16 %v1140
        %v1177 = vunpack.c.l.b16 %v1141
        %v1178 = vpack.c.b16 %v1163, %v1162
        %v1179 = vpack.c.b16 %v1165, %v1164
        %v1180 = vpack.c.b16 %v1167, %v1166
        %v1181 = vpack.c.b16 %v1169, %v1168
        %v1182 = vpack.c.b16 %v1171, %v1170
        %v1183 = vpack.c.b16 %v1173, %v1172
        %v1184 = vpack.c.b16 %v1175, %v1174
        %v1185 = vpack.c.b16 %v1177, %v1176
        %1194 = vmatpush.bf16.msra.mxu0 %v1185
        %1195 = vmatpush.bf16.msra.mxu0 %v1184
        %1196 = vmatpush.bf16.msra.mxu0 %v1183
        %1197 = vmatpush.bf16.msra.mxu0 %v1182
        %1198 = vmatpush.bf16.msra.mxu0 %v1181
        %1199 = vmatpush.bf16.msra.mxu0 %v1180
        %1200 = vmatpush.bf16.msra.mxu0 %v1179
        %1201 = vmatpush.bf16.msra.mxu0 %v1178
        %1202 = vmatmul.bf16.gmra.mxu0 %v1125
        %v1203 = vpop.f32.mrf.mxu0
        %v1204 = vadd.f32 %v1144, %v1203
        %v1205 = vpop.f32.mrf.mxu0
        %1206 = vdwg.mxu0
        %v1207 = vadd.f32 %v1078, %v1204
        %v1208 = vld [vmem:[%s690] sm:$0x1]
        %v1209 = vld [vmem:[%s693] sm:$0x1]
        %v1210 = vsel %vm724, %v1207, 0.0
        %1211 = vadd.xlane.f32.xlu0 %v1210
        %v1212 = vpop.xlane.xlu0 %1211
        %v1213 = vmul.f32 %v1212, %v1051
        %v1214 = vsub.f32 %v1207, %v1213
        %v1215 = vmul.f32 %v1214, %v1214
        %v1216 = vsel %vm724, %v1215, 0.0
        %1217 = vadd.xlane.f32.xlu0 %v1216
        %v1218 = vpop.xlane.xlu0 %1217
        %v1219 = vmul.f32 %v1218, %v1051
        %v1220 = vadd.f32 %v1219, 1e-12
        %v1221 = vrsqrt.pop %v1220
        %v1222 = vmul.f32 %v1221, %v1220
        %v1223 = vmul.f32 %v1222, %v1221
        %v1224 = vmul.f32 0.5, %v1223
        %v1225 = vsub.f32 1.5, %v1224
        %v1226 = vmul.f32 %v1221, %v1225
        %vm1227 = vweird.f32 %v1220
        %vm1228 = vweird.f32 %v1221
        %vm1229 = vmor %vm1227, %vm1228
        %v1230 = vsel %vm1229, %v1221, %v1226
        %v1231 = vmul.f32 %v1214, %v1230
        %v1233 = vperm.slane %v1208, 0
        %v1235 = vmul.f32 %v1231, %v1233
        %v1237 = vperm.slane %v1209, 0
        %v1239 = vadd.f32 %v1235, %v1237
        %1240 = vst.msk [vmem:[#allocation2] sm:$0xff] %vm724, %v1239
        %p1241 = scmp.eq.s32.totalorder %s34, 1
        // Predicated region
        $region85: #{tpu_custom_call.1} parent=79 // pred_check
          %p1242 = pneg %p1241
        $region86: #{tpu_custom_call.1} parent=79 // pred_check_branch
          %1244 = sbr.rel (%p1242) target = $region88
        $region87: #{tpu_custom_call.1} parent=79 // pred_region
          %v1245 = vld [vmem:[%s13] sm:$0x1]
          %v1246 = vld [vmem:[%s14] sm:$0x1]
          %v1247 = vsel %vm724, %v1239, 0.0
          %1248 = vadd.xlane.f32.xlu0 %v1247
          %v1249 = vpop.xlane.xlu0 %1248
          %v1250 = vmul.f32 %v1249, %v1051
          %v1251 = vsub.f32 %v1239, %v1250
          %v1252 = vmul.f32 %v1251, %v1251
          %v1253 = vsel %vm724, %v1252, 0.0
          %1254 = vadd.xlane.f32.xlu0 %v1253
          %v1255 = vpop.xlane.xlu0 %1254
          %v1256 = vmul.f32 %v1255, %v1051
          %v1257 = vadd.f32 %v1256, 1e-12
          %v1258 = vrsqrt.pop %v1257
          %v1259 = vmul.f32 %v1258, %v1257
          %v1260 = vmul.f32 %v1259, %v1258
          %v1261 = vmul.f32 0.5, %v1260
          %v1262 = vsub.f32 1.5, %v1261
          %v1263 = vmul.f32 %v1258, %v1262
          %vm1264 = vweird.f32 %v1257
          %vm1265 = vweird.f32 %v1258
          %vm1266 = vmor %vm1264, %vm1265
          %v1267 = vsel %vm1266, %v1258, %v1263
          %v1268 = vmul.f32 %v1251, %v1267
          %v1270 = vperm.slane %v1245, 0
          %v1272 = vmul.f32 %v1268, %v1270
          %v1274 = vperm.slane %v1246, 0
          %v1276 = vadd.f32 %v1272, %v1274
          %1277 = vst.msk [vmem:[%s645] sm:$0xff] %vm724, %v1276
        $region88: #{tpu_custom_call.1} parent=79 // pred_fallthru
          _
        %s1278 = sand.u32 %s429, 1
        %s1279 = scalar_lea.sflag [#allocation4], %s1278
        %s1280 = sand.u32 %s429, 1
        %s1281 = smul.addr %s1280, 8
        %s1282 = scalar_lea.vmem [#allocation3], %s1281
        // Predicated region
        $region89: #{tpu_custom_call.1} parent=79 // pred_check
          %p1283 = pneg %p439
        $region90: #{tpu_custom_call.1} parent=79 // pred_check_branch
          %1285 = sbr.rel (%p1283) target = $region92
        $region91: #{tpu_custom_call.1} parent=79 // pred_region
          %1287 = vsyncadd %s1279, 0
          %s1288 = smul.addr %s33, 8
          %s1289 = scalar_lea.hbm %s15, %s1288
          %s1291 = sshll.u32 %s1282, 4
          %s1292 = int_to_ptr.vmem [resolvable:$true] %s1291
          %s1293 = sshll.u32 %s1289, 4
          %s1294 = int_to_ptr.hbm [resolvable:$true] %s1293
          %1296 = dma.vmem_to_hbm [thread:$0]  %s1292, 128, %s1294, %s1279
        $region92: #{tpu_custom_call.1} parent=79 // pred_fallthru
          _
      $region80: #{tpu_custom_call.1} parent=5 // pred_fallthru
        _
      %p1297 = scmp.le.s32.totalorder 2, %s24
      // Predicated region
      $region93: #{tpu_custom_call.1} parent=5 // pred_check
        %p1298 = pneg %p1297
      $region94: #{tpu_custom_call.1} parent=5 // pred_check_branch
        %1300 = sbr.rel (%p1298) target = $region96
      $region95: #{tpu_custom_call.1} parent=5 // pred_region
        %s1301 = ssub.s32 %s24, 2
        // Predicated region
        $region97: #{tpu_custom_call.1} parent=95 // pred_check
          %p1302 = pneg %p445
        $region98: #{tpu_custom_call.1} parent=95 // pred_check_branch
          %1304 = sbr.rel (%p1302) target = $region100
        $region99: #{tpu_custom_call.1} parent=95 // pred_region
          %s1305 = sand.u32 %s430, 1
          %s1306 = scalar_lea.sflag [#allocation4], %s1305
          %s1307 = sand.u32 %s430, 1
          %s1308 = smul.addr %s1307, 8
          %s1309 = scalar_lea.vmem [#allocation3], %s1308
          %1311 = dma.done %s1306, 128
        $region100: #{tpu_custom_call.1} parent=95 // pred_fallthru
          _
      $region96: #{tpu_custom_call.1} parent=5 // pred_fallthru
        _
    $region6: #{tpu_custom_call.1} parent=1 // loop_footer
      %s28 = sadd.s32 1, %s24
    $region7: #{tpu_custom_call.1} parent=1 // loop_footer_branch
      %23 = sbr.rel target = $region3
    $region8: #{tpu_custom_call.1} parent=1 // loop_exit
      _
    %1312 = vsyncpa [#allocation4], 1
    %s1313 = scalar_lea.sflag [#allocation4], 1
    %1314 = vsyncpa %s1313, 1

</llo_original>
